<compile_context>
chip_gen: v7x
topology: tpu7x:2x2x1
jax: 0.10.0
libtpu: 0.0.40
codegen_flags: <defaults>
</compile_context>

<pallas_src>
import functools

import jax
import jax.numpy as jnp
from jax import lax
from jax.experimental import pallas as pl
from jax.experimental.pallas import tpu as pltpu


def _pick_tile(dim, candidates):
    """Largest candidate that evenly divides `dim`, else the full extent."""
    for c in candidates:
        if c <= dim and dim % c == 0:
            return c
    return dim


# ---------------------------------------------------------------------------
# 1) QKV projection GEMM that writes its output directly in the
#    attention-friendly layout (3, nH, B, S, hd).
# ---------------------------------------------------------------------------
def _qkv_proj_kernel(x_ref, w_ref, o_ref, acc_ref):
    k = pl.program_id(4)

    @pl.when(k == 0)
    def _():
        acc_ref[...] = jnp.zeros(acc_ref.shape, acc_ref.dtype)

    acc_ref[...] += jnp.dot(x_ref[...], w_ref[...],
                            preferred_element_type=jnp.float32)

    @pl.when(k == pl.num_programs(4) - 1)
    def _():
        o_ref[...] = acc_ref[...].astype(o_ref.dtype)


def qkv_projection(x, w_r):
    """x: (B, S, H); w_r: (3, nH, H, hd)  ->  (3, nH, B, S, hd)."""
    B, S, H = x.shape
    _, nH, _, hd = w_r.shape
    ts = _pick_tile(S, (256, 128, 64, 32, 16, 8))
    tk = _pick_tile(H, (512, 256, 128))
    grid = (3, nH, B, S // ts, H // tk)
    return pl.pallas_call(
        _qkv_proj_kernel,
        out_shape=jax.ShapeDtypeStruct((3, nH, B, S, hd), x.dtype),
        grid_spec=pltpu.PrefetchScalarGridSpec(
            num_scalar_prefetch=0,
            grid=grid,
            in_specs=[
                pl.BlockSpec((None, ts, tk),
                             lambda g, h, b, si, k: (b, si, k)),
                pl.BlockSpec((None, None, tk, hd),
                             lambda g, h, b, si, k: (g, h, k, 0)),
            ],
            out_specs=pl.BlockSpec((None, None, None, ts, hd),
                                   lambda g, h, b, si, k: (g, h, b, si, 0)),
            scratch_shapes=[pltpu.VMEM((ts, hd), jnp.float32)]),
        compiler_params=pltpu.CompilerParams(
            dimension_semantics=("parallel", "parallel", "parallel",
                                 "parallel", "arbitrary")),
    )(x, w_r)


# ---------------------------------------------------------------------------
# 2) Fused RoPE + scale + scores + mask + online softmax + PV (flash style).
# ---------------------------------------------------------------------------
def _rope_rotate(x, tab, half):
    """x: (rows, hd) model dtype, laid out [real half | imag half];
    tab: (rows, hd) f32 laid out [cos | sin].  Returns f32 (rows, hd)."""
    cos = tab[:, :half]
    sin = tab[:, half:]
    x1 = x[:, :half].astype(jnp.float32)
    x2 = x[:, half:].astype(jnp.float32)
    return jnp.concatenate([x1 * cos - x2 * sin, x1 * sin + x2 * cos], axis=-1)


def _attn_kernel(q_ref, k_ref, v_ref, ropeq_ref, ropek_ref, mask_ref, o_ref,
                 m_sc, l_sc, acc_sc, *, scale):
    ki = pl.program_id(3)

    @pl.when(ki == 0)
    def _():
        m_sc[...] = jnp.full(m_sc.shape, -jnp.inf, m_sc.dtype)
        l_sc[...] = jnp.zeros(l_sc.shape, l_sc.dtype)
        acc_sc[...] = jnp.zeros(acc_sc.shape, acc_sc.dtype)

    half = q_ref.shape[-1] // 2
    dt = q_ref.dtype
    # RoPE fused in-kernel; q also gets the 1/sqrt(head_dim) scaling.
    # Cast back to model dtype so the MXU runs at bf16 rate for bf16 models.
    q = (_rope_rotate(q_ref[...], ropeq_ref[...], half) * scale).astype(dt)
    k = _rope_rotate(k_ref[...], ropek_ref[...], half).astype(dt)

    # q @ k^T without an explicit in-kernel transpose (contract last dims).
    s = lax.dot_general(q, k, (((1,), (1,)), ((), ())),
                        preferred_element_type=jnp.float32)      # (tq, tk)
    s = s + mask_ref[...].astype(jnp.float32)

    m_prev = m_sc[...]
    m_new = jnp.maximum(m_prev, s.max(axis=-1, keepdims=True))
    alpha = jnp.exp(m_prev - m_new)
    p = jnp.exp(s - m_new)
    l_sc[...] = alpha * l_sc[...] + p.sum(axis=-1, keepdims=True)
    acc_sc[...] = alpha * acc_sc[...] + jnp.dot(
        p.astype(v_ref.dtype), v_ref[...], preferred_element_type=jnp.float32)
    m_sc[...] = m_new

    @pl.when(ki == pl.num_programs(3) - 1)
    def _():
        inv_l = pl.reciprocal(l_sc[...], approx=True)
        o_ref[...] = (acc_sc[...] * inv_l).astype(o_ref.dtype)


def fused_attention(qkv, rope_tab, mask, *, scale):
    """qkv: (3, nH, B, S, hd); rope_tab: (S, hd) f32 [cos|sin];
    mask: (1|B, 1|H, S, S) additive  ->  (nH, B, S, hd)."""
    _, nH, B, S, hd = qkv.shape
    Bm, Hm = mask.shape[0], mask.shape[1]
    tq = _pick_tile(S, (256, 128, 64, 32, 16, 8))
    tk = _pick_tile(S, (512, 256, 128, 64, 32, 16, 8))
    grid = (B, nH, S // tq, S // tk)

    def q_idx(b, h, qi, ki):
        return (0, h, b, qi, 0)

    def k_idx(b, h, qi, ki):
        return (1, h, b, ki, 0)

    def v_idx(b, h, qi, ki):
        return (2, h, b, ki, 0)

    def ropeq_idx(b, h, qi, ki):
        return (qi, 0)

    def ropek_idx(b, h, qi, ki):
        return (ki, 0)

    def mask_idx(b, h, qi, ki):
        # Broadcast dims of the mask are pinned to block 0 (no materialization).
        return (b if Bm != 1 else 0, h if Hm != 1 else 0, qi, ki)

    def out_idx(b, h, qi, ki):
        return (h, b, qi, 0)

    return pl.pallas_call(
        functools.partial(_attn_kernel, scale=scale),
        out_shape=jax.ShapeDtypeStruct((nH, B, S, hd), qkv.dtype),
        grid_spec=pltpu.PrefetchScalarGridSpec(
            num_scalar_prefetch=0,
            grid=grid,
            in_specs=[
                pl.BlockSpec((None, None, None, tq, hd), q_idx),
                pl.BlockSpec((None, None, None, tk, hd), k_idx),
                pl.BlockSpec((None, None, None, tk, hd), v_idx),
                pl.BlockSpec((tq, hd), ropeq_idx),
                pl.BlockSpec((tk, hd), ropek_idx),
                pl.BlockSpec((None, None, tq, tk), mask_idx),
            ],
            out_specs=pl.BlockSpec((None, None, tq, hd), out_idx),
            scratch_shapes=[pltpu.VMEM((tq, 1), jnp.float32),
                            pltpu.VMEM((tq, 1), jnp.float32),
                            pltpu.VMEM((tq, hd), jnp.float32)]),
        compiler_params=pltpu.CompilerParams(
            dimension_semantics=("parallel", "parallel", "parallel",
                                 "arbitrary")),
    )(qkv, qkv, qkv, rope_tab, rope_tab, mask)


# ---------------------------------------------------------------------------
# 3) Output projection GEMM that gathers its K-dim per head directly from the
#    (nH, B, S, hd) attention output (no XLA transpose back to (B, S, H)).
# ---------------------------------------------------------------------------
def _o_proj_kernel(a_ref, w_ref, o_ref, acc_ref):
    kh = pl.program_id(3)

    @pl.when(kh == 0)
    def _():
        acc_ref[...] = jnp.zeros(acc_ref.shape, acc_ref.dtype)

    acc_ref[...] += jnp.dot(a_ref[...], w_ref[...],
                            preferred_element_type=jnp.float32)

    @pl.when(kh == pl.num_programs(3) - 1)
    def _():
        o_ref[...] = acc_ref[...].astype(o_ref.dtype)


def o_projection(attn, w_r):
    """attn: (nH, B, S, hd); w_r: (nH, hd, H)  ->  (B, S, H)."""
    nH, B, S, hd = attn.shape
    H = w_r.shape[-1]
    ts = _pick_tile(S, (256, 128, 64, 32, 16, 8))
    tn = _pick_tile(H, (512, 256, 128))
    grid = (B, S // ts, H // tn, nH)
    return pl.pallas_call(
        _o_proj_kernel,
        out_shape=jax.ShapeDtypeStruct((B, S, H), attn.dtype),
        grid_spec=pltpu.PrefetchScalarGridSpec(
            num_scalar_prefetch=0,
            grid=grid,
            in_specs=[
                pl.BlockSpec((None, None, ts, hd),
                             lambda b, si, j, kh: (kh, b, si, 0)),
                pl.BlockSpec((None, hd, tn),
                             lambda b, si, j, kh: (kh, 0, j)),
            ],
            out_specs=pl.BlockSpec((None, ts, tn),
                                   lambda b, si, j, kh: (b, si, j)),
            scratch_shapes=[pltpu.VMEM((ts, tn), jnp.float32)]),
        compiler_params=pltpu.CompilerParams(
            dimension_semantics=("parallel", "parallel", "parallel",
                                 "arbitrary")),
    )(attn, w_r)


# ---------------------------------------------------------------------------
# Full GemmaAttention forward.
# ---------------------------------------------------------------------------
def gemma_attention(hidden_states, w_qkv, w_o, freqs_real, freqs_imag, mask,
                    *, num_heads, head_dim):
    B, S, H = hidden_states.shape
    assert H == num_heads * head_dim
    scaling = head_dim ** -0.5
    dt = hidden_states.dtype

    # Fold the interleaved (even/odd) RoPE pairing into a static permutation of
    # the q/k output features of the qkv weight: each head's features become
    # [even indices | odd indices] == [real half | imag half].  Attention scores
    # are invariant to a consistent per-head permutation of q/k features and v
    # is untouched, so the module output is unchanged.
    perm_head = jnp.concatenate([jnp.arange(0, head_dim, 2),
                                 jnp.arange(1, head_dim, 2)])
    qk_perm = (jnp.arange(num_heads)[:, None] * head_dim
               + perm_head[None, :]).reshape(-1)
    perm = jnp.concatenate([qk_perm, H + qk_perm, 2 * H + jnp.arange(H)])
    w_qkv_p = w_qkv[perm]                                      # (3H, H)
    # (3, nH, H_in, hd): the qkv GEMM's B operand, MXU-friendly per (group, head).
    w_qkv_r = w_qkv_p.reshape(3, num_heads, head_dim, H).transpose(0, 1, 3, 2)
    # (nH, hd, H_out): the o_proj GEMM's B operand, K-chunked per head.
    w_o_r = w_o.T.reshape(num_heads, head_dim, H)

    # Shared cos|sin table, indexed by the S-tile inside the attention kernel.
    rope_tab = jnp.concatenate([freqs_real, freqs_imag],
                               axis=-1).astype(jnp.float32)    # (S, hd)

    if mask.ndim == 2:
        mask = mask[None, None]
    elif mask.ndim == 3:
        mask = mask[:, None]

    qkv = qkv_projection(hidden_states, w_qkv_r.astype(dt))    # (3, nH, B, S, hd)
    attn = fused_attention(qkv, rope_tab, mask, scale=scaling)  # (nH, B, S, hd)
    out = o_projection(attn, w_o_r.astype(dt))                  # (B, S, H)
    return out


# ---------------------------------------------------------------------------
# Pure-JAX reference mirroring the PyTorch forward exactly (interleaved RoPE).
# ---------------------------------------------------------------------------
def _reference_attention(x, w_qkv, w_o, freqs_real, freqs_imag, mask,
                         num_heads, head_dim):
    B, S, H = x.shape
    scaling = head_dim ** -0.5
    qkv = jnp.einsum("bsh,oh->bso", x, w_qkv)
    qkv = qkv.reshape(B, S, 3, num_heads, head_dim)
    q, k, v = qkv[:, :, 0], qkv[:, :, 1], qkv[:, :, 2]

    def rope_ref(t):
        t_ = t.astype(jnp.float32).reshape(B, S, num_heads, head_dim // 2, 2)
        real, imag = t_[..., 0], t_[..., 1]
        fr = freqs_real[None, :, None, :]
        fi = freqs_imag[None, :, None, :]
        rr = real * fr - imag * fi
        ri = real * fi + imag * fr
        return jnp.stack([rr, ri], axis=-1).reshape(B, S, num_heads, head_dim)

    q = rope_ref(q) * scaling
    k = rope_ref(k)
    q = jnp.transpose(q, (0, 2, 1, 3))
    k = jnp.transpose(k, (0, 2, 1, 3))
    v = jnp.transpose(v, (0, 2, 1, 3))
    scores = jnp.einsum("bhqd,bhkd->bhqk", q, k) + mask
    probs = jax.nn.softmax(scores, axis=-1)
    out = jnp.einsum("bhqk,bhkd->bhqd", probs, v)
    out = jnp.transpose(out, (0, 2, 1, 3)).reshape(B, S, H)
    return jnp.einsum("bsh,oh->bso", out, w_o)


if __name__ == "__main__":
    key = jax.random.PRNGKey(0)
    k1, k2, k3 = jax.random.split(key, 3)

    # Small but faithful Gemma shapes (hidden = num_heads * head_dim, as asserted
    # by the module): batch=2, seq=8, num_heads=4, head_dim=256, hidden=1024.
    batch, seq = 2, 8
    num_heads, head_dim = 4, 256
    hidden = num_heads * head_dim

    x = jax.random.normal(k1, (batch, seq, hidden), dtype=jnp.float32)
    w_qkv = jax.random.normal(k2, (3 * hidden, hidden), dtype=jnp.float32) * 0.02
    w_o = jax.random.normal(k3, (hidden, hidden), dtype=jnp.float32) * 0.02

    # Rotary tables: freqs_cis = (cos, sin), each (seq, head_dim // 2).
    inv_freq = 1.0 / (10000.0 ** (jnp.arange(0, head_dim, 2,
                                              dtype=jnp.float32) / head_dim))
    freqs = jnp.outer(jnp.arange(seq, dtype=jnp.float32), inv_freq)
    freqs_real = jnp.cos(freqs)
    freqs_imag = jnp.sin(freqs)

    # Additive causal mask, broadcastable to (batch, heads, seq, seq).
    causal = jnp.tril(jnp.ones((seq, seq), dtype=bool))
    mask = jnp.where(causal, 0.0, -1e9).astype(jnp.float32)[None, None]

    attn_fn = jax.jit(functools.partial(
        gemma_attention, num_heads=num_heads, head_dim=head_dim))
    out = attn_fn(x, w_qkv, w_o, freqs_real, freqs_imag, mask)
    jax.block_until_ready(out)

    ref = _reference_attention(x, w_qkv, w_o, freqs_real, freqs_imag, mask,
                               num_heads, head_dim)
    assert out.shape == (batch, seq, hidden) and out.dtype == x.dtype
    max_err = float(jnp.max(jnp.abs(out - ref)))
    assert jnp.allclose(out, ref, atol=2e-2, rtol=2e-2), f"max abs err {max_err}"

    print("KERNEL_OK")
</pallas_src>

<mosaic_0001>
module attributes {stable_mosaic.version = 11 : i64} {
  func.func private @main(%arg0: i32) attributes {dimension_semantics = [#tpu.dimension_semantics<core_parallel>], iteration_bounds = array<i64: 2>, tpu.core_type = #tpu.core_type<sc_scalar_subcore>, window_params = []} {
    return
  }
}

module attributes {stable_mosaic.version = 11 : i64} {
  func.func private @main(%arg0: i32) attributes {dimension_semantics = [#tpu.dimension_semantics<core_parallel>], iteration_bounds = array<i64: 2>, tpu.core_type = #tpu.core_type<sc_scalar_subcore>, window_params = []} {
    return
  }
}

module attributes {stable_mosaic.version = 11 : i64} {
  func.func @_qkv_proj_kernel(%arg0: i32, %arg1: i32, %arg2: i32, %arg3: i32, %arg4: i32, %arg5: memref<1x8x512xf32, #tpu.memory_space<vmem>>, %arg6: memref<1x1x512x256xf32, #tpu.memory_space<vmem>>, %arg7: memref<1x1x1x8x256xf32, #tpu.memory_space<vmem>>, %arg8: memref<8x256xf32, #tpu.memory_space<vmem>>) attributes {dimension_semantics = [#tpu.dimension_semantics<parallel>, #tpu.dimension_semantics<parallel>, #tpu.dimension_semantics<parallel>, #tpu.dimension_semantics<parallel>, #tpu.dimension_semantics<arbitrary>], iteration_bounds = array<i64: 3, 4, 2, 1, 2>, scalar_prefetch = 0 : i64, scratch_operands = 1 : i64, tpu.core_type = #tpu.core_type<tc>, window_params = [{transform_indices = @transform_0, window_bounds = array<i64: 1, 8, 512>}, {transform_indices = @transform_1, window_bounds = array<i64: 1, 1, 512, 256>}, {transform_indices = @transform_2, window_bounds = array<i64: 1, 1, 1, 8, 256>}]} {
    %c0_i32 = arith.constant 0 : i32
    %0 = arith.cmpi eq, %arg4, %c0_i32 : i32
    %1 = arith.extui %0 : i1 to i32
    %c0_i32_0 = arith.constant 0 : i32
    %2 = arith.cmpi ne, %1, %c0_i32_0 : i32
    scf.if %2 {
      %cst_12 = arith.constant 0.000000e+00 : f32
      %14 = vector.broadcast %cst_12 : f32 to vector<8x256xf32>
      %c0_13 = arith.constant 0 : index
      %c0_14 = arith.constant 0 : index
      %15 = vector.load %arg8[%c0_13, %c0_14] : memref<8x256xf32, #tpu.memory_space<vmem>>, vector<8x256xf32>
      tpu.vector_store %arg8[%c0_13, %c0_14], %14 {strides = array<i32>} : memref<8x256xf32, #tpu.memory_space<vmem>>, vector<8x256xf32>,
    } else {
    }
    %c0 = arith.constant 0 : index
    %c0_1 = arith.constant 0 : index
    %3 = vector.load %arg8[%c0, %c0_1] : memref<8x256xf32, #tpu.memory_space<vmem>>, vector<8x256xf32>
    %c0_2 = arith.constant 0 : index
    %c0_3 = arith.constant 0 : index
    %c0_4 = arith.constant 0 : index
    %4 = vector.load %arg5[%c0_2, %c0_3, %c0_4] : memref<1x8x512xf32, #tpu.memory_space<vmem>>, vector<1x8x512xf32>
    %5 = vector.shape_cast %4 : vector<1x8x512xf32> to vector<8x512xf32>
    %c0_5 = arith.constant 0 : index
    %c0_6 = arith.constant 0 : index
    %c0_7 = arith.constant 0 : index
    %c0_8 = arith.constant 0 : index
    %6 = vector.load %arg6[%c0_5, %c0_6, %c0_7, %c0_8] : memref<1x1x512x256xf32, #tpu.memory_space<vmem>>, vector<1x1x512x256xf32>
    %7 = vector.shape_cast %6 : vector<1x1x512x256xf32> to vector<512x256xf32>
    %cst = arith.constant dense<0.000000e+00> : vector<8x256xf32>
    %8 = tpu.matmul %5, %7, %cst {dimension_numbers = #tpu.dot_dimension_numbers<[1], [0], [0], [1], [0, 0, 1, 1], [], []>} : vector<8x512xf32>, vector<512x256xf32>, vector<8x256xf32> -> vector<8x256xf32>
    %9 = arith.addf %3, %8 : vector<8x256xf32>
    %c0_9 = arith.constant 0 : index
    %c0_10 = arith.constant 0 : index
    %10 = vector.load %arg8[%c0_9, %c0_10] : memref<8x256xf32, #tpu.memory_space<vmem>>, vector<8x256xf32>
    tpu.vector_store %arg8[%c0_9, %c0_10], %9 {strides = array<i32>} : memref<8x256xf32, #tpu.memory_space<vmem>>, vector<8x256xf32>,
    %c1_i32 = arith.constant 1 : i32
    %11 = arith.cmpi eq, %arg4, %c1_i32 : i32
    %12 = arith.extui %11 : i1 to i32
    %c0_i32_11 = arith.constant 0 : i32
    %13 = arith.cmpi ne, %12, %c0_i32_11 : i32
    scf.if %13 {
      %c0_12 = arith.constant 0 : index
      %c0_13 = arith.constant 0 : index
      %14 = vector.load %arg8[%c0_12, %c0_13] : memref<8x256xf32, #tpu.memory_space<vmem>>, vector<8x256xf32>
      %c0_14 = arith.constant 0 : index
      %c0_15 = arith.constant 0 : index
      %c0_16 = arith.constant 0 : index
      %c0_17 = arith.constant 0 : index
      %c0_18 = arith.constant 0 : index
      %15 = vector.load %arg7[%c0_14, %c0_15, %c0_16, %c0_17, %c0_18] : memref<1x1x1x8x256xf32, #tpu.memory_space<vmem>>, vector<1x1x1x8x256xf32>
      %16 = vector.shape_cast %15 : vector<1x1x1x8x256xf32> to vector<8x256xf32>
      %17 = vector.shape_cast %14 : vector<8x256xf32> to vector<1x1x1x8x256xf32>
      tpu.vector_store %arg7[%c0_14, %c0_15, %c0_16, %c0_17, %c0_18], %17 {strides = array<i32>} : memref<1x1x1x8x256xf32, #tpu.memory_space<vmem>>, vector<1x1x1x8x256xf32>,
    } else {
    }
    return
  }
  func.func @transform_0(%arg0: i32, %arg1: i32, %arg2: i32, %arg3: i32, %arg4: i32) -> (i32, i32, i32) {
    %c0_i32 = arith.constant 0 : i32
    return %arg2, %arg3, %arg4 : i32, i32, i32
  }
  func.func @transform_1(%arg0: i32, %arg1: i32, %arg2: i32, %arg3: i32, %arg4: i32) -> (i32, i32, i32, i32) {
    %c0_i32 = arith.constant 0 : i32
    %c0_i32_0 = arith.constant 0 : i32
    return %arg0, %arg1, %arg4, %c0_i32 : i32, i32, i32, i32
  }
  func.func @transform_2(%arg0: i32, %arg1: i32, %arg2: i32, %arg3: i32, %arg4: i32) -> (i32, i32, i32, i32, i32) {
    %c0_i32 = arith.constant 0 : i32
    %c0_i32_0 = arith.constant 0 : i32
    return %arg0, %arg1, %arg2, %arg3, %c0_i32 : i32, i32, i32, i32, i32
  }
}

module attributes {stable_mosaic.version = 11 : i64} {
  func.func @_attn_kernel(%arg0: i32, %arg1: i32, %arg2: i32, %arg3: i32, %arg4: memref<1x1x1x8x256xf32, #tpu.memory_space<vmem>>, %arg5: memref<1x1x1x8x256xf32, #tpu.memory_space<vmem>>, %arg6: memref<1x1x1x8x256xf32, #tpu.memory_space<vmem>>, %arg7: memref<8x256xf32, #tpu.memory_space<vmem>>, %arg8: memref<8x256xf32, #tpu.memory_space<vmem>>, %arg9: memref<1x1x8x8xf32, #tpu.memory_space<vmem>>, %arg10: memref<1x1x8x256xf32, #tpu.memory_space<vmem>>, %arg11: memref<8x1xf32, #tpu.memory_space<vmem>>, %arg12: memref<8x1xf32, #tpu.memory_space<vmem>>, %arg13: memref<8x256xf32, #tpu.memory_space<vmem>>) attributes {dimension_semantics = [#tpu.dimension_semantics<parallel>, #tpu.dimension_semantics<parallel>, #tpu.dimension_semantics<parallel>, #tpu.dimension_semantics<arbitrary>], iteration_bounds = array<i64: 2, 4, 1, 1>, scalar_prefetch = 0 : i64, scratch_operands = 3 : i64, tpu.core_type = #tpu.core_type<tc>, window_params = [{transform_indices = @transform_0, window_bounds = array<i64: 1, 1, 1, 8, 256>}, {transform_indices = @transform_1, window_bounds = array<i64: 1, 1, 1, 8, 256>}, {transform_indices = @transform_2, window_bounds = array<i64: 1, 1, 1, 8, 256>}, {transform_indices = @transform_3, window_bounds = array<i64: 8, 256>}, {transform_indices = @transform_4, window_bounds = array<i64: 8, 256>}, {transform_indices = @transform_5, window_bounds = array<i64: 1, 1, 8, 8>}, {transform_indices = @transform_6, window_bounds = array<i64: 1, 1, 8, 256>}]} {
    %c0_i32 = arith.constant 0 : i32
    %0 = arith.cmpi eq, %arg3, %c0_i32 : i32
    %1 = arith.extui %0 : i1 to i32
    %c0_i32_0 = arith.constant 0 : i32
    %2 = arith.cmpi ne, %1, %c0_i32_0 : i32
    scf.if %2 {
      %cst_41 = arith.constant 0xFF800000 : f32
      %64 = vector.broadcast %cst_41 : f32 to vector<8x1xf32>
      %c0_42 = arith.constant 0 : index
      %c0_43 = arith.constant 0 : index
      %65 = vector.load %arg11[%c0_42, %c0_43] : memref<8x1xf32, #tpu.memory_space<vmem>>, vector<8x1xf32>
      tpu.vector_store %arg11[%c0_42, %c0_43], %64 {strides = array<i32>} : memref<8x1xf32, #tpu.memory_space<vmem>>, vector<8x1xf32>,
      %cst_44 = arith.constant 0.000000e+00 : f32
      %66 = vector.broadcast %cst_44 : f32 to vector<8x1xf32>
      %c0_45 = arith.constant 0 : index
      %c0_46 = arith.constant 0 : index
      %67 = vector.load %arg12[%c0_45, %c0_46] : memref<8x1xf32, #tpu.memory_space<vmem>>, vector<8x1xf32>
      tpu.vector_store %arg12[%c0_45, %c0_46], %66 {strides = array<i32>} : memref<8x1xf32, #tpu.memory_space<vmem>>, vector<8x1xf32>,
      %cst_47 = arith.constant 0.000000e+00 : f32
      %68 = vector.broadcast %cst_47 : f32 to vector<8x256xf32>
      %c0_48 = arith.constant 0 : index
      %c0_49 = arith.constant 0 : index
      %69 = vector.load %arg13[%c0_48, %c0_49] : memref<8x256xf32, #tpu.memory_space<vmem>>, vector<8x256xf32>
      tpu.vector_store %arg13[%c0_48, %c0_49], %68 {strides = array<i32>} : memref<8x256xf32, #tpu.memory_space<vmem>>, vector<8x256xf32>,
    } else {
    }
    %c0 = arith.constant 0 : index
    %c0_1 = arith.constant 0 : index
    %c0_2 = arith.constant 0 : index
    %c0_3 = arith.constant 0 : index
    %c0_4 = arith.constant 0 : index
    %3 = vector.load %arg4[%c0, %c0_1, %c0_2, %c0_3, %c0_4] : memref<1x1x1x8x256xf32, #tpu.memory_space<vmem>>, vector<1x1x1x8x256xf32>
    %4 = vector.shape_cast %3 : vector<1x1x1x8x256xf32> to vector<8x256xf32>
    %c0_5 = arith.constant 0 : index
    %c0_6 = arith.constant 0 : index
    %5 = vector.load %arg7[%c0_5, %c0_6] : memref<8x256xf32, #tpu.memory_space<vmem>>, vector<8x256xf32>
    %6 = vector.extract_strided_slice %5 {offsets = [0, 0], sizes = [8, 128], strides = [1, 1]} : vector<8x256xf32> to vector<8x128xf32>
    %7 = vector.extract_strided_slice %5 {offsets = [0, 128], sizes = [8, 128], strides = [1, 1]} : vector<8x256xf32> to vector<8x128xf32>
    %8 = vector.extract_strided_slice %4 {offsets = [0, 0], sizes = [8, 128], strides = [1, 1]} : vector<8x256xf32> to vector<8x128xf32>
    %9 = vector.extract_strided_slice %4 {offsets = [0, 128], sizes = [8, 128], strides = [1, 1]} : vector<8x256xf32> to vector<8x128xf32>
    %10 = arith.mulf %8, %6 : vector<8x128xf32>
    %11 = arith.mulf %9, %7 : vector<8x128xf32>
    %12 = arith.subf %10, %11 : vector<8x128xf32>
    %13 = arith.mulf %8, %7 : vector<8x128xf32>
    %14 = arith.mulf %9, %6 : vector<8x128xf32>
    %15 = arith.addf %13, %14 : vector<8x128xf32>
    %16 = tpu.concatenate %12, %15 in 1 : vector<8x128xf32>, vector<8x128xf32> -> vector<8x256xf32>
    %cst = arith.constant 6.250000e-02 : f32
    %17 = vector.broadcast %cst : f32 to vector<8x256xf32>
    %18 = arith.mulf %16, %17 : vector<8x256xf32>
    %c0_7 = arith.constant 0 : index
    %c0_8 = arith.constant 0 : index
    %c0_9 = arith.constant 0 : index
    %c0_10 = arith.constant 0 : index
    %c0_11 = arith.constant 0 : index
    %19 = vector.load %arg5[%c0_7, %c0_8, %c0_9, %c0_10, %c0_11] : memref<1x1x1x8x256xf32, #tpu.memory_space<vmem>>, vector<1x1x1x8x256xf32>
    %20 = vector.shape_cast %19 : vector<1x1x1x8x256xf32> to vector<8x256xf32>
    %c0_12 = arith.constant 0 : index
    %c0_13 = arith.constant 0 : index
    %21 = vector.load %arg8[%c0_12, %c0_13] : memref<8x256xf32, #tpu.memory_space<vmem>>, vector<8x256xf32>
    %22 = vector.extract_strided_slice %21 {offsets = [0, 0], sizes = [8, 128], strides = [1, 1]} : vector<8x256xf32> to vector<8x128xf32>
    %23 = vector.extract_strided_slice %21 {offsets = [0, 128], sizes = [8, 128], strides = [1, 1]} : vector<8x256xf32> to vector<8x128xf32>
    %24 = vector.extract_strided_slice %20 {offsets = [0, 0], sizes = [8, 128], strides = [1, 1]} : vector<8x256xf32> to vector<8x128xf32>
    %25 = vector.extract_strided_slice %20 {offsets = [0, 128], sizes = [8, 128], strides = [1, 1]} : vector<8x256xf32> to vector<8x128xf32>
    %26 = arith.mulf %24, %22 : vector<8x128xf32>
    %27 = arith.mulf %25, %23 : vector<8x128xf32>
    %28 = arith.subf %26, %27 : vector<8x128xf32>
    %29 = arith.mulf %24, %23 : vector<8x128xf32>
    %30 = arith.mulf %25, %22 : vector<8x128xf32>
    %31 = arith.addf %29, %30 : vector<8x128xf32>
    %32 = tpu.concatenate %28, %31 in 1 : vector<8x128xf32>, vector<8x128xf32> -> vector<8x256xf32>
    %cst_14 = arith.constant dense<0.000000e+00> : vector<8x8xf32>
    %33 = tpu.matmul %18, %32, %cst_14 {dimension_numbers = #tpu.dot_dimension_numbers<[1], [1], [0], [0], [0, 0, 1, 0], [], []>} : vector<8x256xf32>, vector<8x256xf32>, vector<8x8xf32> -> vector<8x8xf32>
    %c0_15 = arith.constant 0 : index
    %c0_16 = arith.constant 0 : index
    %c0_17 = arith.constant 0 : index
    %c0_18 = arith.constant 0 : index
    %34 = vector.load %arg9[%c0_15, %c0_16, %c0_17, %c0_18] : memref<1x1x8x8xf32, #tpu.memory_space<vmem>>, vector<1x1x8x8xf32>
    %35 = vector.shape_cast %34 : vector<1x1x8x8xf32> to vector<8x8xf32>
    %36 = arith.addf %33, %35 : vector<8x8xf32>
    %c0_19 = arith.constant 0 : index
    %c0_20 = arith.constant 0 : index
    %37 = vector.load %arg11[%c0_19, %c0_20] : memref<8x1xf32, #tpu.memory_space<vmem>>, vector<8x1xf32>
    %cst_21 = arith.constant dense<0xFF800000> : vector<8xf32>
    %38 = vector.multi_reduction <maximumf>, %36, %cst_21 [1] : vector<8x8xf32> to vector<8xf32>
    %39 = vector.shape_cast %38 : vector<8xf32> to vector<8x1xf32>
    %40 = arith.maximumf %37, %39 : vector<8x1xf32>
    %41 = arith.subf %37, %40 : vector<8x1xf32>
    %42 = math.exp %41 : vector<8x1xf32>
    %43 = vector.broadcast %40 : vector<8x1xf32> to vector<8x8xf32>
    %44 = arith.subf %36, %43 : vector<8x8xf32>
    %45 = math.exp %44 : vector<8x8xf32>
    %c0_22 = arith.constant 0 : index
    %c0_23 = arith.constant 0 : index
    %46 = vector.load %arg12[%c0_22, %c0_23] : memref<8x1xf32, #tpu.memory_space<vmem>>, vector<8x1xf32>
    %47 = arith.mulf %42, %46 : vector<8x1xf32>
    %cst_24 = arith.constant dense<0.000000e+00> : vector<8xf32>
    %48 = vector.multi_reduction <add>, %45, %cst_24 [1] : vector<8x8xf32> to vector<8xf32>
    %49 = vector.shape_cast %48 : vector<8xf32> to vector<8x1xf32>
    %50 = arith.addf %47, %49 : vector<8x1xf32>
    %c0_25 = arith.constant 0 : index
    %c0_26 = arith.constant 0 : index
    %51 = vector.load %arg12[%c0_25, %c0_26] : memref<8x1xf32, #tpu.memory_space<vmem>>, vector<8x1xf32>
    tpu.vector_store %arg12[%c0_25, %c0_26], %50 {strides = array<i32>} : memref<8x1xf32, #tpu.memory_space<vmem>>, vector<8x1xf32>,
    %c0_27 = arith.constant 0 : index
    %c0_28 = arith.constant 0 : index
    %52 = vector.load %arg13[%c0_27, %c0_28] : memref<8x256xf32, #tpu.memory_space<vmem>>, vector<8x256xf32>
    %53 = vector.broadcast %42 : vector<8x1xf32> to vector<8x256xf32>
    %54 = arith.mulf %53, %52 : vector<8x256xf32>
    %c0_29 = arith.constant 0 : index
    %c0_30 = arith.constant 0 : index
    %c0_31 = arith.constant 0 : index
    %c0_32 = arith.constant 0 : index
    %c0_33 = arith.constant 0 : index
    %55 = vector.load %arg6[%c0_29, %c0_30, %c0_31, %c0_32, %c0_33] : memref<1x1x1x8x256xf32, #tpu.memory_space<vmem>>, vector<1x1x1x8x256xf32>
    %56 = vector.shape_cast %55 : vector<1x1x1x8x256xf32> to vector<8x256xf32>
    %cst_34 = arith.constant dense<0.000000e+00> : vector<8x256xf32>
    %57 = tpu.matmul %45, %56, %cst_34 {dimension_numbers = #tpu.dot_dimension_numbers<[1], [0], [0], [1], [0, 0, 1, 1], [], []>} : vector<8x8xf32>, vector<8x256xf32>, vector<8x256xf32> -> vector<8x256xf32>
    %58 = arith.addf %54, %57 : vector<8x256xf32>
    %c0_35 = arith.constant 0 : index
    %c0_36 = arith.constant 0 : index
    %59 = vector.load %arg13[%c0_35, %c0_36] : memref<8x256xf32, #tpu.memory_space<vmem>>, vector<8x256xf32>
    tpu.vector_store %arg13[%c0_35, %c0_36], %58 {strides = array<i32>} : memref<8x256xf32, #tpu.memory_space<vmem>>, vector<8x256xf32>,
    %c0_37 = arith.constant 0 : index
    %c0_38 = arith.constant 0 : index
    %60 = vector.load %arg11[%c0_37, %c0_38] : memref<8x1xf32, #tpu.memory_space<vmem>>, vector<8x1xf32>
    tpu.vector_store %arg11[%c0_37, %c0_38], %40 {strides = array<i32>} : memref<8x1xf32, #tpu.memory_space<vmem>>, vector<8x1xf32>,
    %c0_i32_39 = arith.constant 0 : i32
    %61 = arith.cmpi eq, %arg3, %c0_i32_39 : i32
    %62 = arith.extui %61 : i1 to i32
    %c0_i32_40 = arith.constant 0 : i32
    %63 = arith.cmpi ne, %62, %c0_i32_40 : i32
    scf.if %63 {
      %c0_41 = arith.constant 0 : index
      %c0_42 = arith.constant 0 : index
      %64 = vector.load %arg12[%c0_41, %c0_42] : memref<8x1xf32, #tpu.memory_space<vmem>>, vector<8x1xf32>
      %65 = tpu.reciprocal %64 {approx = true} : vector<8x1xf32> -> vector<8x1xf32>
      %c0_43 = arith.constant 0 : index
      %c0_44 = arith.constant 0 : index
      %66 = vector.load %arg13[%c0_43, %c0_44] : memref<8x256xf32, #tpu.memory_space<vmem>>, vector<8x256xf32>
      %67 = vector.broadcast %65 : vector<8x1xf32> to vector<8x256xf32>
      %68 = arith.mulf %66, %67 : vector<8x256xf32>
      %c0_45 = arith.constant 0 : index
      %c0_46 = arith.constant 0 : index
      %c0_47 = arith.constant 0 : index
      %c0_48 = arith.constant 0 : index
      %69 = vector.load %arg10[%c0_45, %c0_46, %c0_47, %c0_48] : memref<1x1x8x256xf32, #tpu.memory_space<vmem>>, vector<1x1x8x256xf32>
      %70 = vector.shape_cast %69 : vector<1x1x8x256xf32> to vector<8x256xf32>
      %71 = vector.shape_cast %68 : vector<8x256xf32> to vector<1x1x8x256xf32>
      tpu.vector_store %arg10[%c0_45, %c0_46, %c0_47, %c0_48], %71 {strides = array<i32>} : memref<1x1x8x256xf32, #tpu.memory_space<vmem>>, vector<1x1x8x256xf32>,
    } else {
    }
    return
  }
  func.func @transform_0(%arg0: i32, %arg1: i32, %arg2: i32, %arg3: i32) -> (i32, i32, i32, i32, i32) {
    %c0_i32 = arith.constant 0 : i32
    %c0_i32_0 = arith.constant 0 : i32
    %c0_i32_1 = arith.constant 0 : i32
    return %c0_i32, %arg1, %arg0, %arg2, %c0_i32_0 : i32, i32, i32, i32, i32
  }
  func.func @transform_1(%arg0: i32, %arg1: i32, %arg2: i32, %arg3: i32) -> (i32, i32, i32, i32, i32) {
    %c1_i32 = arith.constant 1 : i32
    %c0_i32 = arith.constant 0 : i32
    %c0_i32_0 = arith.constant 0 : i32
    return %c1_i32, %arg1, %arg0, %arg3, %c0_i32 : i32, i32, i32, i32, i32
  }
  func.func @transform_2(%arg0: i32, %arg1: i32, %arg2: i32, %arg3: i32) -> (i32, i32, i32, i32, i32) {
    %c2_i32 = arith.constant 2 : i32
    %c0_i32 = arith.constant 0 : i32
    %c0_i32_0 = arith.constant 0 : i32
    return %c2_i32, %arg1, %arg0, %arg3, %c0_i32 : i32, i32, i32, i32, i32
  }
  func.func @transform_3(%arg0: i32, %arg1: i32, %arg2: i32, %arg3: i32) -> (i32, i32) {
    %c0_i32 = arith.constant 0 : i32
    %c0_i32_0 = arith.constant 0 : i32
    return %arg2, %c0_i32 : i32, i32
  }
  func.func @transform_4(%arg0: i32, %arg1: i32, %arg2: i32, %arg3: i32) -> (i32, i32) {
    %c0_i32 = arith.constant 0 : i32
    %c0_i32_0 = arith.constant 0 : i32
    return %arg3, %c0_i32 : i32, i32
  }
  func.func @transform_5(%arg0: i32, %arg1: i32, %arg2: i32, %arg3: i32) -> (i32, i32, i32, i32) {
    %c0_i32 = arith.constant 0 : i32
    %c0_i32_0 = arith.constant 0 : i32
    %c0_i32_1 = arith.constant 0 : i32
    return %c0_i32, %c0_i32_0, %arg2, %arg3 : i32, i32, i32, i32
  }
  func.func @transform_6(%arg0: i32, %arg1: i32, %arg2: i32, %arg3: i32) -> (i32, i32, i32, i32) {
    %c0_i32 = arith.constant 0 : i32
    %c0_i32_0 = arith.constant 0 : i32
    return %arg1, %arg0, %arg2, %c0_i32 : i32, i32, i32, i32
  }
}

module attributes {stable_mosaic.version = 11 : i64} {
  func.func @_o_proj_kernel(%arg0: i32, %arg1: i32, %arg2: i32, %arg3: i32, %arg4: memref<1x1x8x256xf32, #tpu.memory_space<vmem>>, %arg5: memref<1x256x512xf32, #tpu.memory_space<vmem>>, %arg6: memref<1x8x512xf32, #tpu.memory_space<vmem>>, %arg7: memref<8x512xf32, #tpu.memory_space<vmem>>) attributes {dimension_semantics = [#tpu.dimension_semantics<parallel>, #tpu.dimension_semantics<parallel>, #tpu.dimension_semantics<parallel>, #tpu.dimension_semantics<arbitrary>], iteration_bounds = array<i64: 2, 1, 2, 4>, scalar_prefetch = 0 : i64, scratch_operands = 1 : i64, tpu.core_type = #tpu.core_type<tc>, window_params = [{transform_indices = @transform_0, window_bounds = array<i64: 1, 1, 8, 256>}, {transform_indices = @transform_1, window_bounds = array<i64: 1, 256, 512>}, {transform_indices = @transform_2, window_bounds = array<i64: 1, 8, 512>}]} {
    %c0_i32 = arith.constant 0 : i32
    %0 = arith.cmpi eq, %arg3, %c0_i32 : i32
    %1 = arith.extui %0 : i1 to i32
    %c0_i32_0 = arith.constant 0 : i32
    %2 = arith.cmpi ne, %1, %c0_i32_0 : i32
    scf.if %2 {
      %cst_12 = arith.constant 0.000000e+00 : f32
      %14 = vector.broadcast %cst_12 : f32 to vector<8x512xf32>
      %c0_13 = arith.constant 0 : index
      %c0_14 = arith.constant 0 : index
      %15 = vector.load %arg7[%c0_13, %c0_14] : memref<8x512xf32, #tpu.memory_space<vmem>>, vector<8x512xf32>
      tpu.vector_store %arg7[%c0_13, %c0_14], %14 {strides = array<i32>} : memref<8x512xf32, #tpu.memory_space<vmem>>, vector<8x512xf32>,
    } else {
    }
    %c0 = arith.constant 0 : index
    %c0_1 = arith.constant 0 : index
    %3 = vector.load %arg7[%c0, %c0_1] : memref<8x512xf32, #tpu.memory_space<vmem>>, vector<8x512xf32>
    %c0_2 = arith.constant 0 : index
    %c0_3 = arith.constant 0 : index
    %c0_4 = arith.constant 0 : index
    %c0_5 = arith.constant 0 : index
    %4 = vector.load %arg4[%c0_2, %c0_3, %c0_4, %c0_5] : memref<1x1x8x256xf32, #tpu.memory_space<vmem>>, vector<1x1x8x256xf32>
    %5 = vector.shape_cast %4 : vector<1x1x8x256xf32> to vector<8x256xf32>
    %c0_6 = arith.constant 0 : index
    %c0_7 = arith.constant 0 : index
    %c0_8 = arith.constant 0 : index
    %6 = vector.load %arg5[%c0_6, %c0_7, %c0_8] : memref<1x256x512xf32, #tpu.memory_space<vmem>>, vector<1x256x512xf32>
    %7 = vector.shape_cast %6 : vector<1x256x512xf32> to vector<256x512xf32>
    %cst = arith.constant dense<0.000000e+00> : vector<8x512xf32>
    %8 = tpu.matmul %5, %7, %cst {dimension_numbers = #tpu.dot_dimension_numbers<[1], [0], [0], [1], [0, 0, 1, 1], [], []>} : vector<8x256xf32>, vector<256x512xf32>, vector<8x512xf32> -> vector<8x512xf32>
    %9 = arith.addf %3, %8 : vector<8x512xf32>
    %c0_9 = arith.constant 0 : index
    %c0_10 = arith.constant 0 : index
    %10 = vector.load %arg7[%c0_9, %c0_10] : memref<8x512xf32, #tpu.memory_space<vmem>>, vector<8x512xf32>
    tpu.vector_store %arg7[%c0_9, %c0_10], %9 {strides = array<i32>} : memref<8x512xf32, #tpu.memory_space<vmem>>, vector<8x512xf32>,
    %c3_i32 = arith.constant 3 : i32
    %11 = arith.cmpi eq, %arg3, %c3_i32 : i32
    %12 = arith.extui %11 : i1 to i32
    %c0_i32_11 = arith.constant 0 : i32
    %13 = arith.cmpi ne, %12, %c0_i32_11 : i32
    scf.if %13 {
      %c0_12 = arith.constant 0 : index
      %c0_13 = arith.constant 0 : index
      %14 = vector.load %arg7[%c0_12, %c0_13] : memref<8x512xf32, #tpu.memory_space<vmem>>, vector<8x512xf32>
      %c0_14 = arith.constant 0 : index
      %c0_15 = arith.constant 0 : index
      %c0_16 = arith.constant 0 : index
      %15 = vector.load %arg6[%c0_14, %c0_15, %c0_16] : memref<1x8x512xf32, #tpu.memory_space<vmem>>, vector<1x8x512xf32>
      %16 = vector.shape_cast %15 : vector<1x8x512xf32> to vector<8x512xf32>
      %17 = vector.shape_cast %14 : vector<8x512xf32> to vector<1x8x512xf32>
      tpu.vector_store %arg6[%c0_14, %c0_15, %c0_16], %17 {strides = array<i32>} : memref<1x8x512xf32, #tpu.memory_space<vmem>>, vector<1x8x512xf32>,
    } else {
    }
    return
  }
  func.func @transform_0(%arg0: i32, %arg1: i32, %arg2: i32, %arg3: i32) -> (i32, i32, i32, i32) {
    %c0_i32 = arith.constant 0 : i32
    %c0_i32_0 = arith.constant 0 : i32
    return %arg3, %arg0, %arg1, %c0_i32 : i32, i32, i32, i32
  }
  func.func @transform_1(%arg0: i32, %arg1: i32, %arg2: i32, %arg3: i32) -> (i32, i32, i32) {
    %c0_i32 = arith.constant 0 : i32
    %c0_i32_0 = arith.constant 0 : i32
    return %arg3, %c0_i32, %arg2 : i32, i32, i32
  }
  func.func @transform_2(%arg0: i32, %arg1: i32, %arg2: i32, %arg3: i32) -> (i32, i32, i32) {
    %c0_i32 = arith.constant 0 : i32
    return %arg0, %arg1, %arg2 : i32, i32, i32
  }
}

</mosaic_0001>

<llo_original>
// kernel: gemma_attention.4
$region0: #{gemma_attention.4}
  #allocation0 [shape = 'u32[]', space=smem, size = 0x4, offset = 0x4, fixed_abs, tag = 'smem constant byte address 0x4 - core index']
  #allocation1 [shape = 'u32[144,128]{1,0:T(1,128)}', space=vmem, size = 0x12000, scoped, tag = 'internal scratch']
  #allocation2 [shape = 'f32[8,1]{1,0:T(8,128)}', space=vmem, size = 0x1000, scoped, tag = 'scratch operand']
  #allocation3 [shape = 'f32[8,1]{1,0:T(8,128)}', space=vmem, size = 0x1000, scoped, tag = 'scratch operand']
  #allocation4 [shape = 'f32[8,256]{1,0:T(8,128)}', space=vmem, size = 0x2000, scoped, tag = 'scratch operand']
  %s0 = inlined_call_operand.vmem [shape: f32[3,4,2,8,256], index: 0, kind: input, shape index: {}, may-alias: {0,1,2}]
  %s1 = inlined_call_operand.vmem [shape: f32[3,4,2,8,256], index: 1, kind: input, shape index: {}, may-alias: {0,1,2}]
  %s2 = inlined_call_operand.vmem [shape: f32[3,4,2,8,256], index: 2, kind: input, shape index: {}, may-alias: {0,1,2}]
  %s3 = inlined_call_operand.vmem [shape: f32[8,256], index: 3, kind: input, shape index: {}, may-alias: {3,4}]
  %s4 = inlined_call_operand.vmem [shape: f32[8,256], index: 4, kind: input, shape index: {}, may-alias: {3,4}]
  %s5 = inlined_call_operand.vmem [shape: f32[1,1,8,8], index: 5, kind: input, shape index: {}]
  %s6 = inlined_call_operand.vmem [shape: f32[4,2,8,256], index: 6, kind: output, shape index: {}]
  %s7 = sld [smem:[#allocation0]]
  $region65: #{gemma_attention.4} parent=0
    _
  %s9 = ssub.s32 1, %s7
  %s10 = scalar_select 0, %s9, %s7
  loop: start=0, step=1, limit=10
  $region2: #{gemma_attention.4} parent=0 // loop_pre_header
    _
  $region3: #{gemma_attention.4} parent=0 // loop_header
    %s12 = sphi 0, %s16
    %p13 = scmp.ge.s32.totalorder %s12, 10
    %s19 = sphi 0, %s45
    %s20 = sphi 0, %s41
    %s21 = sphi 0, %s37
    %s22 = sphi 0, %s33
    %s23 = sphi 0, %s19
    %s24 = sphi 0, %s20
    %s25 = sphi 0, %s21
    %s26 = sphi 0, %s22
    %s27 = sphi 0, %s23
    %s28 = sphi 0, %s24
    %s29 = sphi 0, %s25
    %s30 = sphi 0, %s26
    %s52 = sphi 0, %s54
    %s55 = sphi 0, %s52
    %s56 = sphi 0, %s55
    %s72 = sphi 0, %s56
    %s82 = sphi 0, %s84
    %s85 = sphi 0, %s82
    %s86 = sphi 0, %s85
    %s102 = sphi 0, %s86
    %s112 = sphi 0, %s114
    %s115 = sphi 0, %s112
    %s116 = sphi 0, %s115
    %s132 = sphi 0, %s116
    %s138 = sphi 0, %s140
    %s141 = sphi 0, %s138
    %s142 = sphi 0, %s141
    %s158 = sphi 0, %s142
    %s164 = sphi 0, %s166
    %s167 = sphi 0, %s164
    %s168 = sphi 0, %s167
    %s184 = sphi 0, %s168
    %s192 = sphi 0, %s194
    %s195 = sphi 0, %s192
    %s196 = sphi 0, %s195
    %s212 = sphi 0, %s196
    %s222 = sphi 0, %s224
    %s225 = sphi 0, %s222
    %s226 = sphi 0, %s225
    %s242 = sphi 0, %s226
  $region4: #{gemma_attention.4} parent=0 // loop_header_branch
    %15 = sbr.rel (%p13) target = $region8
  $region5: #{gemma_attention.4} parent=0 // loop_body
    %s17 = ssub.s32 %s12, 1
    %s18 = ssub.s32 %s12, 2
    %s31 = sadd.s32 1, %s22
    %p32 = scmp.ge.s32.totalorder %s31, 1
    %s33 = scalar_select %p32, 0, %s31
    %s34 = sadd.s32 1, %s21
    %s35 = scalar_select %p32, %s34, %s21
    %p36 = scmp.ge.s32.totalorder %s35, 1
    %s37 = scalar_select %p36, 0, %s35
    %s38 = sadd.s32 1, %s20
    %s39 = scalar_select %p36, %s38, %s20
    %p40 = scmp.ge.s32.totalorder %s39, 4
    %s41 = scalar_select %p40, 0, %s39
    %s42 = sadd.s32 1, %s19
    %s43 = scalar_select %p40, %s42, %s19
    %p44 = scmp.ge.s32.totalorder %s43, 2
    %s45 = scalar_select %p44, 0, %s43
    %s46 = ssub.s32 %s20, %s41
    %s47 = ssub.s32 %s19, %s45
    %s48 = sor.u32 %s46, %s47
    %s49 = ssub.s32 %s21, %s37
    %s50 = sor.u32 %s48, %s49
    %p51 = scmp.eq.s32.totalorder %s50, 0
    %s53 = sadd.s32 %s52, 1
    %s54 = scalar_select %p51, %s52, %s53
    %p57 = pneg %p51
    %p58 = scmp.eq.s32.totalorder %s12, 7
    %p59 = por %p57, %p58
    %p60 = scmp.ne.s32.totalorder %s52, %s55
    %p61 = scmp.eq.s32.totalorder %s12, 0
    %p62 = por %p60, %p61
    %p63 = scmp.ne.s32.totalorder %s52, %s55
    %p64 = scmp.eq.s32.totalorder %s17, 7
    %p65 = por %p63, %p64
    %p66 = scmp.ne.s32.totalorder %s55, %s56
    %p67 = scmp.eq.s32.totalorder %s17, 0
    %p68 = por %p66, %p67
    %p69 = scmp.ne.s32.totalorder %s55, %s56
    %p70 = scmp.eq.s32.totalorder %s18, 7
    %p71 = por %p69, %p70
    %p73 = scmp.ne.s32.totalorder %s56, %s72
    %p74 = scmp.eq.s32.totalorder %s18, 0
    %p75 = por %p73, %p74
    %s76 = ssub.s32 %s20, %s41
    %s77 = ssub.s32 %s19, %s45
    %s78 = sor.u32 %s76, %s77
    %s79 = ssub.s32 %s22, %s33
    %s80 = sor.u32 %s78, %s79
    %p81 = scmp.eq.s32.totalorder %s80, 0
    %s83 = sadd.s32 %s82, 1
    %s84 = scalar_select %p81, %s82, %s83
    %p87 = pneg %p81
    %p88 = scmp.eq.s32.totalorder %s12, 7
    %p89 = por %p87, %p88
    %p90 = scmp.ne.s32.totalorder %s82, %s85
    %p91 = scmp.eq.s32.totalorder %s12, 0
    %p92 = por %p90, %p91
    %p93 = scmp.ne.s32.totalorder %s82, %s85
    %p94 = scmp.eq.s32.totalorder %s17, 7
    %p95 = por %p93, %p94
    %p96 = scmp.ne.s32.totalorder %s85, %s86
    %p97 = scmp.eq.s32.totalorder %s17, 0
    %p98 = por %p96, %p97
    %p99 = scmp.ne.s32.totalorder %s85, %s86
    %p100 = scmp.eq.s32.totalorder %s18, 7
    %p101 = por %p99, %p100
    %p103 = scmp.ne.s32.totalorder %s86, %s102
    %p104 = scmp.eq.s32.totalorder %s18, 0
    %p105 = por %p103, %p104
    %s106 = ssub.s32 %s20, %s41
    %s107 = ssub.s32 %s19, %s45
    %s108 = sor.u32 %s106, %s107
    %s109 = ssub.s32 %s22, %s33
    %s110 = sor.u32 %s108, %s109
    %p111 = scmp.eq.s32.totalorder %s110, 0
    %s113 = sadd.s32 %s112, 1
    %s114 = scalar_select %p111, %s112, %s113
    %p117 = pneg %p111
    %p118 = scmp.eq.s32.totalorder %s12, 7
    %p119 = por %p117, %p118
    %p120 = scmp.ne.s32.totalorder %s112, %s115
    %p121 = scmp.eq.s32.totalorder %s12, 0
    %p122 = por %p120, %p121
    %p123 = scmp.ne.s32.totalorder %s112, %s115
    %p124 = scmp.eq.s32.totalorder %s17, 7
    %p125 = por %p123, %p124
    %p126 = scmp.ne.s32.totalorder %s115, %s116
    %p127 = scmp.eq.s32.totalorder %s17, 0
    %p128 = por %p126, %p127
    %p129 = scmp.ne.s32.totalorder %s115, %s116
    %p130 = scmp.eq.s32.totalorder %s18, 7
    %p131 = por %p129, %p130
    %p133 = scmp.ne.s32.totalorder %s116, %s132
    %p134 = scmp.eq.s32.totalorder %s18, 0
    %p135 = por %p133, %p134
    %s136 = ssub.s32 %s21, %s37
    %p137 = scmp.eq.s32.totalorder %s136, 0
    %s139 = sadd.s32 %s138, 1
    %s140 = scalar_select %p137, %s138, %s139
    %p143 = pneg %p137
    %p144 = scmp.eq.s32.totalorder %s12, 7
    %p145 = por %p143, %p144
    %p146 = scmp.ne.s32.totalorder %s138, %s141
    %p147 = scmp.eq.s32.totalorder %s12, 0
    %p148 = por %p146, %p147
    %p149 = scmp.ne.s32.totalorder %s138, %s141
    %p150 = scmp.eq.s32.totalorder %s17, 7
    %p151 = por %p149, %p150
    %p152 = scmp.ne.s32.totalorder %s141, %s142
    %p153 = scmp.eq.s32.totalorder %s17, 0
    %p154 = por %p152, %p153
    %p155 = scmp.ne.s32.totalorder %s141, %s142
    %p156 = scmp.eq.s32.totalorder %s18, 7
    %p157 = por %p155, %p156
    %p159 = scmp.ne.s32.totalorder %s142, %s158
    %p160 = scmp.eq.s32.totalorder %s18, 0
    %p161 = por %p159, %p160
    %s162 = ssub.s32 %s22, %s33
    %p163 = scmp.eq.s32.totalorder %s162, 0
    %s165 = sadd.s32 %s164, 1
    %s166 = scalar_select %p163, %s164, %s165
    %p169 = pneg %p163
    %p170 = scmp.eq.s32.totalorder %s12, 7
    %p171 = por %p169, %p170
    %p172 = scmp.ne.s32.totalorder %s164, %s167
    %p173 = scmp.eq.s32.totalorder %s12, 0
    %p174 = por %p172, %p173
    %p175 = scmp.ne.s32.totalorder %s164, %s167
    %p176 = scmp.eq.s32.totalorder %s17, 7
    %p177 = por %p175, %p176
    %p178 = scmp.ne.s32.totalorder %s167, %s168
    %p179 = scmp.eq.s32.totalorder %s17, 0
    %p180 = por %p178, %p179
    %p181 = scmp.ne.s32.totalorder %s167, %s168
    %p182 = scmp.eq.s32.totalorder %s18, 7
    %p183 = por %p181, %p182
    %p185 = scmp.ne.s32.totalorder %s168, %s184
    %p186 = scmp.eq.s32.totalorder %s18, 0
    %p187 = por %p185, %p186
    %s188 = ssub.s32 %s21, %s37
    %s189 = ssub.s32 %s22, %s33
    %s190 = sor.u32 %s188, %s189
    %p191 = scmp.eq.s32.totalorder %s190, 0
    %s193 = sadd.s32 %s192, 1
    %s194 = scalar_select %p191, %s192, %s193
    %p197 = pneg %p191
    %p198 = scmp.eq.s32.totalorder %s12, 7
    %p199 = por %p197, %p198
    %p200 = scmp.ne.s32.totalorder %s192, %s195
    %p201 = scmp.eq.s32.totalorder %s12, 0
    %p202 = por %p200, %p201
    %p203 = scmp.ne.s32.totalorder %s192, %s195
    %p204 = scmp.eq.s32.totalorder %s17, 7
    %p205 = por %p203, %p204
    %p206 = scmp.ne.s32.totalorder %s195, %s196
    %p207 = scmp.eq.s32.totalorder %s17, 0
    %p208 = por %p206, %p207
    %p209 = scmp.ne.s32.totalorder %s195, %s196
    %p210 = scmp.eq.s32.totalorder %s18, 7
    %p211 = por %p209, %p210
    %p213 = scmp.ne.s32.totalorder %s196, %s212
    %p214 = scmp.eq.s32.totalorder %s18, 0
    %p215 = por %p213, %p214
    %s216 = ssub.s32 %s20, %s41
    %s217 = ssub.s32 %s19, %s45
    %s218 = sor.u32 %s216, %s217
    %s219 = ssub.s32 %s21, %s37
    %s220 = sor.u32 %s218, %s219
    %p221 = scmp.eq.s32.totalorder %s220, 0
    %s223 = sadd.s32 %s222, 1
    %s224 = scalar_select %p221, %s222, %s223
    %p227 = pneg %p221
    %p228 = scmp.eq.s32.totalorder %s12, 7
    %p229 = por %p227, %p228
    %p230 = scmp.ne.s32.totalorder %s222, %s225
    %p231 = scmp.eq.s32.totalorder %s12, 0
    %p232 = por %p230, %p231
    %p233 = scmp.ne.s32.totalorder %s222, %s225
    %p234 = scmp.eq.s32.totalorder %s17, 7
    %p235 = por %p233, %p234
    %p236 = scmp.ne.s32.totalorder %s225, %s226
    %p237 = scmp.eq.s32.totalorder %s17, 0
    %p238 = por %p236, %p237
    %p239 = scmp.ne.s32.totalorder %s225, %s226
    %p240 = scmp.eq.s32.totalorder %s18, 7
    %p241 = por %p239, %p240
    %p243 = scmp.ne.s32.totalorder %s226, %s242
    %p244 = scmp.eq.s32.totalorder %s18, 0
    %p245 = por %p243, %p244
    %p246 = scmp.le.s32.totalorder 1, %s12
    %p247 = scmp.lt.s32.totalorder %s12, 9
    %p248 = pnand %p246, %p247
    %p249 = pneg %p248
    // Predicated region
    $region9: #{gemma_attention.4} parent=5 // pred_check
      _
    $region10: #{gemma_attention.4} parent=5 // pred_check_branch
      %251 = sbr.rel (%p248) target = $region12
    $region11: #{gemma_attention.4} parent=5 // pred_region
      %s252 = ssub.s32 %s12, 1
      // Predicated region
      $region13: #{gemma_attention.4} parent=11 // pred_check
        %p253 = pneg %p154
      $region14: #{gemma_attention.4} parent=11 // pred_check_branch
        %255 = sbr.rel (%p253) target = $region16
      $region15: #{gemma_attention.4} parent=11 // pred_region
        %p256 = scmp.lt.s32.totalorder %s25, 0
        %s257 = scalar_select %p256, %s25, 0
        %s258 = smul.addr %s257, 2
        %s259 = smul.addr %s258, 8
        %s260 = scalar_lea.vmem %s3, %s259
      $region16: #{gemma_attention.4} parent=11 // pred_fallthru
        _
      // Predicated region
      $region17: #{gemma_attention.4} parent=11 // pred_check
        %p261 = pneg %p180
      $region18: #{gemma_attention.4} parent=11 // pred_check_branch
        %263 = sbr.rel (%p261) target = $region20
      $region19: #{gemma_attention.4} parent=11 // pred_region
        %p264 = scmp.lt.s32.totalorder %s26, 0
        %s265 = scalar_select %p264, %s26, 0
        %s266 = smul.addr %s265, 2
        %s267 = smul.addr %s266, 8
        %s268 = scalar_lea.vmem %s4, %s267
      $region20: #{gemma_attention.4} parent=11 // pred_fallthru
        _
      // Predicated region
      $region21: #{gemma_attention.4} parent=11 // pred_check
        %p269 = pneg %p208
      $region22: #{gemma_attention.4} parent=11 // pred_check_branch
        %271 = sbr.rel (%p269) target = $region24
      $region23: #{gemma_attention.4} parent=11 // pred_region
        %p272 = scmp.lt.s32.totalorder %s25, 0
        %s273 = scalar_select %p272, %s25, 0
        %p274 = scmp.lt.s32.totalorder %s26, 0
        %s275 = scalar_select %p274, %s26, 0
        %s276 = sadd.s32 %s275, %s273
        %s277 = smul.addr %s276, 8
        %s278 = scalar_lea.vmem %s5, %s277
      $region24: #{gemma_attention.4} parent=11 // pred_fallthru
        _
    $region12: #{gemma_attention.4} parent=5 // pred_fallthru
      _
    %p279 = scmp.lt.s32.totalorder %s12, 8
    // Predicated region
    $region25: #{gemma_attention.4} parent=5 // pred_check
      %p280 = pneg %p279
    $region26: #{gemma_attention.4} parent=5 // pred_check_branch
      %282 = sbr.rel (%p280) target = $region28
    $region27: #{gemma_attention.4} parent=5 // pred_region
      // Predicated region
      $region29: #{gemma_attention.4} parent=27 // pred_check
        %p283 = pneg %p62
      $region30: #{gemma_attention.4} parent=27 // pred_check_branch
        %285 = sbr.rel (%p283) target = $region32
      $region31: #{gemma_attention.4} parent=27 // pred_region
        %p286 = scmp.lt.s32.totalorder %s20, 3
        %s287 = scalar_select %p286, %s20, 3
        %p288 = scmp.lt.s32.totalorder %s19, 1
        %s289 = scalar_select %p288, %s19, 1
        %p290 = scmp.lt.s32.totalorder %s21, 0
        %s291 = scalar_select %p290, %s21, 0
        %s292 = smul.addr %s291, 2
        %s293 = smul.addr %s289, 2
        %s294 = sadd.s32 %s292, %s293
        %s295 = smul.addr %s287, 4
        %s296 = sadd.s32 %s294, %s295
        %s297 = smul.addr %s296, 8
        %s298 = scalar_lea.vmem %s0, %s297
      $region32: #{gemma_attention.4} parent=27 // pred_fallthru
        _
      // Predicated region
      $region33: #{gemma_attention.4} parent=27 // pred_check
        %p299 = pneg %p92
      $region34: #{gemma_attention.4} parent=27 // pred_check_branch
        %301 = sbr.rel (%p299) target = $region36
      $region35: #{gemma_attention.4} parent=27 // pred_region
        %p302 = scmp.lt.s32.totalorder %s20, 3
        %s303 = scalar_select %p302, %s20, 3
        %p304 = scmp.lt.s32.totalorder %s19, 1
        %s305 = scalar_select %p304, %s19, 1
        %p306 = scmp.lt.s32.totalorder %s22, 0
        %s307 = scalar_select %p306, %s22, 0
        %s308 = smul.addr %s307, 2
        %s309 = smul.addr %s305, 2
        %s310 = sadd.s32 %s308, %s309
        %s311 = smul.addr %s303, 4
        %s312 = sadd.s32 %s310, %s311
        %s313 = sadd.s32 %s312, 16
        %s314 = smul.addr %s313, 8
        %s315 = scalar_lea.vmem %s1, %s314
      $region36: #{gemma_attention.4} parent=27 // pred_fallthru
        _
      // Predicated region
      $region37: #{gemma_attention.4} parent=27 // pred_check
        %p316 = pneg %p122
      $region38: #{gemma_attention.4} parent=27 // pred_check_branch
        %318 = sbr.rel (%p316) target = $region40
      $region39: #{gemma_attention.4} parent=27 // pred_region
        %p319 = scmp.lt.s32.totalorder %s20, 3
        %s320 = scalar_select %p319, %s20, 3
        %p321 = scmp.lt.s32.totalorder %s19, 1
        %s322 = scalar_select %p321, %s19, 1
        %p323 = scmp.lt.s32.totalorder %s22, 0
        %s324 = scalar_select %p323, %s22, 0
        %s325 = smul.addr %s324, 2
        %s326 = smul.addr %s322, 2
        %s327 = sadd.s32 %s325, %s326
        %s328 = smul.addr %s320, 4
        %s329 = sadd.s32 %s327, %s328
        %s330 = sadd.s32 %s329, 32
        %s331 = smul.addr %s330, 8
        %s332 = scalar_lea.vmem %s2, %s331
      $region40: #{gemma_attention.4} parent=27 // pred_fallthru
        _
    $region28: #{gemma_attention.4} parent=5 // pred_fallthru
      _
    %p333 = scmp.le.s32.totalorder 1, %s12
    %p334 = scmp.lt.s32.totalorder %s12, 9
    %p335 = pnand %p333, %p334
    %p336 = pneg %p335
    // Predicated region
    $region41: #{gemma_attention.4} parent=5 // pred_check
      _
    $region42: #{gemma_attention.4} parent=5 // pred_check_branch
      %338 = sbr.rel (%p335) target = $region44
    $region43: #{gemma_attention.4} parent=5 // pred_region
      %s339 = ssub.s32 %s12, 1
      %p340 = scmp.lt.s32.totalorder %s24, 3
      %s341 = scalar_select %p340, %s24, 3
      %p342 = scmp.lt.s32.totalorder %s23, 1
      %s343 = scalar_select %p342, %s23, 1
      %p344 = scmp.lt.s32.totalorder %s25, 0
      %s345 = scalar_select %p344, %s25, 0
      %s346 = smul.addr %s345, 2
      %s347 = smul.addr %s343, 2
      %s348 = sadd.s32 %s346, %s347
      %s349 = smul.addr %s341, 4
      %s350 = sadd.s32 %s348, %s349
      %s351 = smul.addr %s350, 8
      %s352 = scalar_lea.vmem %s0, %s351
      %p353 = pneg %p68
      %p354 = pneg %p65
      %p355 = scmp.lt.s32.totalorder %s24, 3
      %s356 = scalar_select %p355, %s24, 3
      %p357 = scmp.lt.s32.totalorder %s23, 1
      %s358 = scalar_select %p357, %s23, 1
      %p359 = scmp.lt.s32.totalorder %s26, 0
      %s360 = scalar_select %p359, %s26, 0
      %s361 = smul.addr %s360, 2
      %s362 = smul.addr %s358, 2
      %s363 = sadd.s32 %s361, %s362
      %s364 = smul.addr %s356, 4
      %s365 = sadd.s32 %s363, %s364
      %s366 = sadd.s32 %s365, 16
      %s367 = smul.addr %s366, 8
      %s368 = scalar_lea.vmem %s1, %s367
      %p369 = pneg %p98
      %p370 = pneg %p95
      %p371 = scmp.lt.s32.totalorder %s24, 3
      %s372 = scalar_select %p371, %s24, 3
      %p373 = scmp.lt.s32.totalorder %s23, 1
      %s374 = scalar_select %p373, %s23, 1
      %p375 = scmp.lt.s32.totalorder %s26, 0
      %s376 = scalar_select %p375, %s26, 0
      %s377 = smul.addr %s376, 2
      %s378 = smul.addr %s374, 2
      %s379 = sadd.s32 %s377, %s378
      %s380 = smul.addr %s372, 4
      %s381 = sadd.s32 %s379, %s380
      %s382 = sadd.s32 %s381, 32
      %s383 = smul.addr %s382, 8
      %s384 = scalar_lea.vmem %s2, %s383
      %p385 = pneg %p128
      %p386 = pneg %p125
      %p387 = scmp.lt.s32.totalorder %s25, 0
      %s388 = scalar_select %p387, %s25, 0
      %s389 = smul.addr %s388, 2
      %s390 = smul.addr %s389, 8
      %s391 = scalar_lea.vmem %s3, %s390
      %p392 = pneg %p154
      %p393 = pneg %p151
      %p394 = scmp.lt.s32.totalorder %s26, 0
      %s395 = scalar_select %p394, %s26, 0
      %s396 = smul.addr %s395, 2
      %s397 = smul.addr %s396, 8
      %s398 = scalar_lea.vmem %s4, %s397
      %p399 = pneg %p180
      %p400 = pneg %p177
      %p401 = scmp.lt.s32.totalorder %s25, 0
      %s402 = scalar_select %p401, %s25, 0
      %p403 = scmp.lt.s32.totalorder %s26, 0
      %s404 = scalar_select %p403, %s26, 0
      %s405 = sadd.s32 %s404, %s402
      %s406 = smul.addr %s405, 8
      %s407 = scalar_lea.vmem %s5, %s406
      %p408 = pneg %p208
      %p409 = pneg %p205
      %p410 = pneg %p238
      %p411 = pneg %p235
      %p412 = scmp.lt.s32.totalorder %s24, 3
      %s413 = scalar_select %p412, %s24, 3
      %p414 = scmp.lt.s32.totalorder %s23, 1
      %s415 = scalar_select %p414, %s23, 1
      %p416 = scmp.lt.s32.totalorder %s25, 0
      %s417 = scalar_select %p416, %s25, 0
      %s418 = smul.addr %s417, 2
      %s419 = smul.addr %s415, 2
      %s420 = sadd.s32 %s418, %s419
      %s421 = smul.addr %s413, 4
      %s422 = sadd.s32 %s420, %s421
      %s423 = smul.addr %s422, 8
      %s424 = scalar_lea.vmem %s6, %s423
      %p425 = scmp.lt.s32.totalorder %s24, 3
      %s426 = scalar_select %p425, %s24, 3
      %p427 = scmp.lt.s32.totalorder %s23, 1
      %s428 = scalar_select %p427, %s23, 1
      %p429 = scmp.lt.s32.totalorder %s25, 0
      %s430 = scalar_select %p429, %s25, 0
      %s431 = smul.addr %s430, 2
      %s432 = smul.addr %s428, 2
      %s433 = sadd.s32 %s431, %s432
      %s434 = smul.addr %s426, 4
      %s435 = sadd.s32 %s433, %s434
      %s436 = smul.addr %s435, 8
      %s437 = scalar_lea.vmem %s0, %s436
      %p438 = scmp.lt.s32.totalorder %s24, 3
      %s439 = scalar_select %p438, %s24, 3
      %p440 = scmp.lt.s32.totalorder %s23, 1
      %s441 = scalar_select %p440, %s23, 1
      %p442 = scmp.lt.s32.totalorder %s26, 0
      %s443 = scalar_select %p442, %s26, 0
      %s444 = smul.addr %s443, 2
      %s445 = smul.addr %s441, 2
      %s446 = sadd.s32 %s444, %s445
      %s447 = smul.addr %s439, 4
      %s448 = sadd.s32 %s446, %s447
      %s449 = sadd.s32 %s448, 16
      %s450 = smul.addr %s449, 8
      %s451 = scalar_lea.vmem %s1, %s450
      %p452 = scmp.lt.s32.totalorder %s24, 3
      %s453 = scalar_select %p452, %s24, 3
      %p454 = scmp.lt.s32.totalorder %s23, 1
      %s455 = scalar_select %p454, %s23, 1
      %p456 = scmp.lt.s32.totalorder %s26, 0
      %s457 = scalar_select %p456, %s26, 0
      %s458 = smul.addr %s457, 2
      %s459 = smul.addr %s455, 2
      %s460 = sadd.s32 %s458, %s459
      %s461 = smul.addr %s453, 4
      %s462 = sadd.s32 %s460, %s461
      %s463 = sadd.s32 %s462, 32
      %s464 = smul.addr %s463, 8
      %s465 = scalar_lea.vmem %s2, %s464
      %p466 = scmp.lt.s32.totalorder %s25, 0
      %s467 = scalar_select %p466, %s25, 0
      %s468 = smul.addr %s467, 2
      %s469 = smul.addr %s468, 8
      %s470 = scalar_lea.vmem %s3, %s469
      %p471 = scmp.lt.s32.totalorder %s26, 0
      %s472 = scalar_select %p471, %s26, 0
      %s473 = smul.addr %s472, 2
      %s474 = smul.addr %s473, 8
      %s475 = scalar_lea.vmem %s4, %s474
      %p476 = scmp.lt.s32.totalorder %s25, 0
      %s477 = scalar_select %p476, %s25, 0
      %p478 = scmp.lt.s32.totalorder %s26, 0
      %s479 = scalar_select %p478, %s26, 0
      %s480 = sadd.s32 %s479, %s477
      %s481 = smul.addr %s480, 8
      %s482 = scalar_lea.vmem %s5, %s481
      %p483 = scmp.lt.s32.totalorder %s24, 3
      %s484 = scalar_select %p483, %s24, 3
      %p485 = scmp.lt.s32.totalorder %s23, 1
      %s486 = scalar_select %p485, %s23, 1
      %p487 = scmp.lt.s32.totalorder %s25, 0
      %s488 = scalar_select %p487, %s25, 0
      %s489 = smul.addr %s488, 2
      %s490 = smul.addr %s486, 2
      %s491 = sadd.s32 %s489, %s490
      %s492 = smul.addr %s484, 4
      %s493 = sadd.s32 %s491, %s492
      %s494 = smul.addr %s493, 8
      %s495 = scalar_lea.vmem %s6, %s494
      %p496 = scmp.eq.s32.totalorder %s26, 0
      // Predicated region
      $region45: #{gemma_attention.4} parent=43 // pred_check
        %p497 = pneg %p496
      $region46: #{gemma_attention.4} parent=43 // pred_check_branch
        %499 = sbr.rel (%p497) target = $region48
      $region47: #{gemma_attention.4} parent=43 // pred_region
        %vm500 = vcmask 7168
        %501 = vst.msk [vmem:[#allocation2] sm:$0xff] %vm500, -inf
        %502 = vst.msk [vmem:[#allocation3] sm:$0xff] %vm500, 0.0
        %503 = vst [vmem:[#allocation4] sm:$0xff] 0.0
        %504 = vst [vmem:[#allocation4 + $0x8] sm:$0xff] 0.0
      $region48: #{gemma_attention.4} parent=43 // pred_fallthru
        _
      %v505 = vld [vmem:[%s437] sm:$0xff]
      %v506 = vld [vmem:[%s437 + $0x8] sm:$0xff]
      %v507 = vld [vmem:[%s470] sm:$0xff]
      %v508 = vld [vmem:[%s470 + $0x8] sm:$0xff]
      %v509 = vmul.f32 %v505, %v507
      %v510 = vmul.f32 %v506, %v508
      %v511 = vsub.f32 %v509, %v510
      %v512 = vmul.f32 %v505, %v508
      %v513 = vmul.f32 %v506, %v507
      %v514 = vadd.f32 %v512, %v513
      %v515 = vmul.f32 %v511, 0.0625
      %v516 = vmul.f32 %v514, 0.0625
      %v517 = vld [vmem:[%s451] sm:$0xff]
      %v518 = vld [vmem:[%s451 + $0x8] sm:$0xff]
      %v519 = vld [vmem:[%s475] sm:$0xff]
      %v520 = vld [vmem:[%s475 + $0x8] sm:$0xff]
      %v521 = vmul.f32 %v517, %v519
      %v522 = vmul.f32 %v518, %v520
      %v523 = vsub.f32 %v521, %v522
      %v524 = vmul.f32 %v517, %v520
      %v525 = vmul.f32 %v518, %v519
      %v526 = vadd.f32 %v524, %v525
      %v527 = vld [vmem:[%s482] sm:$0xff]
      %528 = vmatprep.subr.mxu0 %v526
      %529 = vmatpush1.xpose.msra.mxu0 %v523
      %530 = vmatprep.subr.mxu0 0.0
      %531 = vmatpush1.xpose.msra.mxu0 0.0
      %532 = vmatprep.subr.mxu0 0.0
      %533 = vmatpush1.xpose.msra.mxu0 0.0
      %534 = vmatprep.subr.mxu0 0.0
      %535 = vmatpush1.xpose.msra.mxu0 0.0
      %536 = vmatprep.subr.mxu0 0.0
      %537 = vmatpush1.xpose.msra.mxu0 0.0
      %538 = vmatprep.subr.mxu0 0.0
      %539 = vmatpush1.xpose.msra.mxu0 0.0
      %540 = vmatprep.subr.mxu0 0.0
      %541 = vmatpush1.xpose.msra.mxu0 0.0
      %542 = vmatprep.subr.mxu0 0.0
      %543 = vmatpush1.xpose.msra.mxu0 0.0
      %544 = vmatprep.subr.mxu0 0.0
      %545 = vmatpush1.xpose.msra.mxu0 0.0
      %546 = vmatprep.subr.mxu0 0.0
      %547 = vmatpush1.xpose.msra.mxu0 0.0
      %548 = vmatprep.subr.mxu0 0.0
      %549 = vmatpush1.xpose.msra.mxu0 0.0
      %550 = vmatprep.subr.mxu0 0.0
      %551 = vmatpush1.xpose.msra.mxu0 0.0
      %552 = vmatprep.subr.mxu0 0.0
      %553 = vmatpush1.xpose.msra.mxu0 0.0
      %554 = vmatprep.subr.mxu0 0.0
      %555 = vmatpush1.xpose.msra.mxu0 0.0
      %556 = vmatprep.subr.mxu0 0.0
      %557 = vmatpush1.xpose.msra.mxu0 0.0
      %558 = vmatprep.subr.mxu0 0.0
      %559 = vmatpush1.xpose.msra.mxu0 0.0
      %560 = vmatprep.subr.mxu0 0.0
      %561 = vmatpush1.xpose.msra.mxu0 0.0
      %562 = vmatprep.subr.mxu0 0.0
      %563 = vmatpush1.xpose.msra.mxu0 0.0
      %564 = vmatprep.subr.mxu0 0.0
      %565 = vmatpush1.xpose.msra.mxu0 0.0
      %566 = vmatprep.subr.mxu0 0.0
      %567 = vmatpush1.xpose.msra.mxu0 0.0
      %568 = vmatprep.subr.mxu0 0.0
      %569 = vmatpush1.xpose.msra.mxu0 0.0
      %570 = vmatprep.subr.mxu0 0.0
      %571 = vmatpush1.xpose.msra.mxu0 0.0
      %572 = vmatprep.subr.mxu0 0.0
      %573 = vmatpush1.xpose.msra.mxu0 0.0
      %574 = vmatprep.subr.mxu0 0.0
      %575 = vmatpush1.xpose.msra.mxu0 0.0
      %576 = vmatprep.subr.mxu0 0.0
      %577 = vmatpush1.xpose.msra.mxu0 0.0
      %578 = vmatprep.subr.mxu0 0.0
      %579 = vmatpush1.xpose.msra.mxu0 0.0
      %580 = vmatprep.subr.mxu0 0.0
      %581 = vmatpush1.xpose.msra.mxu0 0.0
      %582 = vmatprep.subr.mxu0 0.0
      %583 = vmatpush1.xpose.msra.mxu0 0.0
      %584 = vmatprep.subr.mxu0 0.0
      %585 = vmatpush1.xpose.msra.mxu0 0.0
      %586 = vmatprep.subr.mxu0 0.0
      %587 = vmatpush1.xpose.msra.mxu0 0.0
      %588 = vmatprep.subr.mxu0 0.0
      %589 = vmatpush1.xpose.msra.mxu0 0.0
      %590 = vmatprep.subr.mxu0 0.0
      %591 = vmatpush1.xpose.msra.mxu0 0.0
      %592 = vmatprep.mubr.f32.mxu0 %v516
      %593 = vmatmul.mubr.f32.gmra.mrb[0].mxu0 %v515
      %v594 = vpop.f32.mrb[0].mxu0
      %v595 = vadd.f32 %v527, %v594
      %v596 = vpop.f32.mrb[0].mxu0
      %597 = vdwg.mxu0
      %v598 = vld [vmem:[#allocation2] sm:$0xff]
      %vm599 = vcmask 64512
      %v600 = vsel %vm599, %v595, -inf
      %601 = vmax.xlane.f32.xlu0 %v600
      %v602 = vpop.xlane.xlu0 %601
      %v603 = vmax.f32 %v598, %v602
      %v604 = vsub.f32 %v598, %v603
      %v605 = vmul.f32 %v604, 1.442695
      %v606 = vpow.pop %v605
      %608 = vset.pattern.permute.xlu0 0
      %609 = vperm.xlu0 %608, %v603
      %v610 = vpop.permute.xlu0 %609
      %v612 = vsub.f32 %v595, %v610
      %v613 = vmul.f32 %v612, 1.442695
      %v614 = vpow.pop %v613
      %v615 = vld [vmem:[#allocation3] sm:$0xff]
      %v616 = vmul.f32 %v606, %v615
      %v617 = vsel %vm599, %v614, 0.0
      %618 = vadd.xlane.f32.xlu0 %v617
      %v619 = vpop.xlane.xlu0 %618
      %v620 = vadd.f32 %v616, %v619
      %vm621 = vcmask 7168
      %622 = vst.msk [vmem:[#allocation3] sm:$0xff] %vm621, %v620
      %v623 = vld [vmem:[#allocation4] sm:$0xff]
      %v624 = vld [vmem:[#allocation4 + $0x8] sm:$0xff]
      %626 = vset.pattern.permute.xlu0 0
      %627 = vperm.xlu0 %626, %v606
      %v628 = vpop.permute.xlu0 %627
      %v630 = vmul.f32 %v628, %v623
      %v631 = vmul.f32 %v628, %v624
      %v632 = vld [vmem:[%s465] sm:$0xff]
      %v633 = vld [vmem:[%s465 + $0x8] sm:$0xff]
      %v635 = vsel %vm599, %v614, 0
      %637 = vmatprep.subr.mxu0 %v633
      %638 = vmatpush1.msra.mxu0 %v632
      %639 = vmatprep.subr.mxu0 0.0
      %640 = vmatpush1.msra.mxu0 0.0
      %641 = vmatprep.subr.mxu0 0.0
      %642 = vmatpush1.msra.mxu0 0.0
      %643 = vmatprep.subr.mxu0 0.0
      %644 = vmatpush1.msra.mxu0 0.0
      %645 = vmatprep.subr.mxu0 0.0
      %646 = vmatpush1.msra.mxu0 0.0
      %647 = vmatprep.subr.mxu0 0.0
      %648 = vmatpush1.msra.mxu0 0.0
      %649 = vmatprep.subr.mxu0 0.0
      %650 = vmatpush1.msra.mxu0 0.0
      %651 = vmatprep.subr.mxu0 0.0
      %652 = vmatpush1.msra.mxu0 0.0
      %653 = vmatprep.subr.mxu0 0.0
      %654 = vmatpush1.msra.mxu0 0.0
      %655 = vmatprep.subr.mxu0 0.0
      %656 = vmatpush1.msra.mxu0 0.0
      %657 = vmatprep.subr.mxu0 0.0
      %658 = vmatpush1.msra.mxu0 0.0
      %659 = vmatprep.subr.mxu0 0.0
      %660 = vmatpush1.msra.mxu0 0.0
      %661 = vmatprep.subr.mxu0 0.0
      %662 = vmatpush1.msra.mxu0 0.0
      %663 = vmatprep.subr.mxu0 0.0
      %664 = vmatpush1.msra.mxu0 0.0
      %665 = vmatprep.subr.mxu0 0.0
      %666 = vmatpush1.msra.mxu0 0.0
      %667 = vmatprep.subr.mxu0 0.0
      %668 = vmatpush1.msra.mxu0 0.0
      %669 = vmatprep.subr.mxu0 0.0
      %670 = vmatpush1.msra.mxu0 0.0
      %671 = vmatprep.subr.mxu0 0.0
      %672 = vmatpush1.msra.mxu0 0.0
      %673 = vmatprep.subr.mxu0 0.0
      %674 = vmatpush1.msra.mxu0 0.0
      %675 = vmatprep.subr.mxu0 0.0
      %676 = vmatpush1.msra.mxu0 0.0
      %677 = vmatprep.subr.mxu0 0.0
      %678 = vmatpush1.msra.mxu0 0.0
      %679 = vmatprep.subr.mxu0 0.0
      %680 = vmatpush1.msra.mxu0 0.0
      %681 = vmatprep.subr.mxu0 0.0
      %682 = vmatpush1.msra.mxu0 0.0
      %683 = vmatprep.subr.mxu0 0.0
      %684 = vmatpush1.msra.mxu0 0.0
      %685 = vmatprep.subr.mxu0 0.0
      %686 = vmatpush1.msra.mxu0 0.0
      %687 = vmatprep.subr.mxu0 0.0
      %688 = vmatpush1.msra.mxu0 0.0
      %689 = vmatprep.subr.mxu0 0.0
      %690 = vmatpush1.msra.mxu0 0.0
      %691 = vmatprep.subr.mxu0 0.0
      %692 = vmatpush1.msra.mxu0 0.0
      %693 = vmatprep.subr.mxu0 0.0
      %694 = vmatpush1.msra.mxu0 0.0
      %695 = vmatprep.subr.mxu0 0.0
      %696 = vmatpush1.msra.mxu0 0.0
      %697 = vmatprep.subr.mxu0 0.0
      %698 = vmatpush1.msra.mxu0 0.0
      %699 = vmatprep.subr.mxu0 0.0
      %700 = vmatpush1.msra.mxu0 0.0
      %701 = vmatprep.mubr.f32.mxu0 0.0
      %702 = vmatmul.mubr.f32.gmra.mrb[0].mxu0 %v635
      %v703 = vpop.f32.mrb[0].mxu0
      %v704 = vadd.f32 0.0, %v703
      %v705 = vpop.f32.mrb[0].mxu0
      %v706 = vadd.f32 0.0, %v705
      %707 = vdwg.mxu0
      %v708 = vadd.f32 %v630, %v704
      %v709 = vadd.f32 %v631, %v706
      %710 = vst [vmem:[#allocation4] sm:$0xff] %v708
      %711 = vst [vmem:[#allocation4 + $0x8] sm:$0xff] %v709
      %712 = vst.msk [vmem:[#allocation2] sm:$0xff] %vm621, %v603
      // Predicated region
      $region49: #{gemma_attention.4} parent=43 // pred_check
        %p713 = pneg %p496
      $region50: #{gemma_attention.4} parent=43 // pred_check_branch
        %715 = sbr.rel (%p713) target = $region52
      $region51: #{gemma_attention.4} parent=43 // pred_region
        %v716 = vld [vmem:[#allocation3] sm:$0xff]
        %v717 = vrcp.pop %v716
        %v718 = vld [vmem:[#allocation4] sm:$0xff]
        %v719 = vld [vmem:[#allocation4 + $0x8] sm:$0xff]
        %721 = vset.pattern.permute.xlu0 0
        %722 = vperm.xlu0 %721, %v717
        %v723 = vpop.permute.xlu0 %722
        %v725 = vmul.f32 %v718, %v723
        %v726 = vmul.f32 %v719, %v723
        %727 = vst [vmem:[%s495] sm:$0xff] %v725
        %728 = vst [vmem:[%s495 + $0x8] sm:$0xff] %v726
      $region52: #{gemma_attention.4} parent=43 // pred_fallthru
        _
      %p729 = scmp.lt.s32.totalorder %s24, 3
      %s730 = scalar_select %p729, %s24, 3
      %p731 = scmp.lt.s32.totalorder %s23, 1
      %s732 = scalar_select %p731, %s23, 1
      %p733 = scmp.lt.s32.totalorder %s25, 0
      %s734 = scalar_select %p733, %s25, 0
      %s735 = smul.addr %s734, 2
      %s736 = smul.addr %s732, 2
      %s737 = sadd.s32 %s735, %s736
      %s738 = smul.addr %s730, 4
      %s739 = sadd.s32 %s737, %s738
      %s740 = smul.addr %s739, 8
      %s741 = scalar_lea.vmem %s6, %s740
      // Predicated region
      $region53: #{gemma_attention.4} parent=43 // pred_check
        %p742 = pneg %p235
      $region54: #{gemma_attention.4} parent=43 // pred_check_branch
        %744 = sbr.rel (%p742) target = $region56
      $region55: #{gemma_attention.4} parent=43 // pred_region
        _
      $region56: #{gemma_attention.4} parent=43 // pred_fallthru
        _
    $region44: #{gemma_attention.4} parent=5 // pred_fallthru
      _
    %p745 = scmp.le.s32.totalorder 2, %s12
    // Predicated region
    $region57: #{gemma_attention.4} parent=5 // pred_check
      %p746 = pneg %p745
    $region58: #{gemma_attention.4} parent=5 // pred_check_branch
      %748 = sbr.rel (%p746) target = $region60
    $region59: #{gemma_attention.4} parent=5 // pred_region
      %s749 = ssub.s32 %s12, 2
      // Predicated region
      $region61: #{gemma_attention.4} parent=59 // pred_check
        %p750 = pneg %p241
      $region62: #{gemma_attention.4} parent=59 // pred_check_branch
        %752 = sbr.rel (%p750) target = $region64
      $region63: #{gemma_attention.4} parent=59 // pred_region
        %p753 = scmp.lt.s32.totalorder %s28, 3
        %s754 = scalar_select %p753, %s28, 3
        %p755 = scmp.lt.s32.totalorder %s27, 1
        %s756 = scalar_select %p755, %s27, 1
        %p757 = scmp.lt.s32.totalorder %s29, 0
        %s758 = scalar_select %p757, %s29, 0
        %s759 = smul.addr %s758, 2
        %s760 = smul.addr %s756, 2
        %s761 = sadd.s32 %s759, %s760
        %s762 = smul.addr %s754, 4
        %s763 = sadd.s32 %s761, %s762
        %s764 = smul.addr %s763, 8
        %s765 = scalar_lea.vmem %s6, %s764
      $region64: #{gemma_attention.4} parent=59 // pred_fallthru
        _
    $region60: #{gemma_attention.4} parent=5 // pred_fallthru
      _
  $region6: #{gemma_attention.4} parent=0 // loop_footer
    %s16 = sadd.s32 1, %s12
  $region7: #{gemma_attention.4} parent=0 // loop_footer_branch
    %11 = sbr.rel target = $region3
  $region8: #{gemma_attention.4} parent=0 // loop_exit
    _

// kernel: gemma_attention.3
$region0: #{gemma_attention.3}
  #allocation0 [shape = 'u32[]', space=smem, size = 0x4, offset = 0x4, fixed_abs, tag = 'smem constant byte address 0x4 - core index']
  #allocation1 [shape = 'u32[144,128]{1,0:T(1,128)}', space=vmem, size = 0x12000, scoped, tag = 'internal scratch']
  #allocation2 [shape = 'f32[8,256]{1,0:T(8,128)}', space=vmem, size = 0x2000, scoped, tag = 'scratch operand']
  %s0 = inlined_call_operand.vmem [shape: f32[2,8,1024], index: 0, kind: input, shape index: {}]
  %s1 = inlined_call_operand.vmem [shape: f32[3,4,1024,256], index: 1, kind: input, shape index: {}]
  %s2 = inlined_call_operand.vmem [shape: f32[3,4,2,8,256], index: 2, kind: output, shape index: {}]
  %s3 = sld [smem:[#allocation0]]
  $region49: #{gemma_attention.3} parent=0
    _
  %s5 = ssub.s32 1, %s3
  %s6 = scalar_select 0, %s5, %s3
  loop: start=0, step=1, limit=50
  $region2: #{gemma_attention.3} parent=0 // loop_pre_header
    _
  $region3: #{gemma_attention.3} parent=0 // loop_header
    %s8 = sphi 0, %s12
    %p9 = scmp.ge.s32.totalorder %s8, 50
    %s15 = sphi 0, %s48
    %s16 = sphi 0, %s44
    %s17 = sphi 0, %s40
    %s18 = sphi 0, %s36
    %s19 = sphi 0, %s32
    %s20 = sphi 0, %s15
    %s21 = sphi 0, %s16
    %s22 = sphi 0, %s17
    %s23 = sphi 0, %s18
    %s24 = sphi 0, %s19
    %s25 = sphi 0, %s20
    %s26 = sphi 0, %s21
    %s27 = sphi 0, %s22
    %s28 = sphi 0, %s23
    %s29 = sphi 0, %s24
    %s55 = sphi 0, %s57
    %s58 = sphi 0, %s55
    %s59 = sphi 0, %s58
    %s75 = sphi 0, %s59
    %s85 = sphi 0, %s87
    %s88 = sphi 0, %s85
    %s89 = sphi 0, %s88
    %s105 = sphi 0, %s89
    %s117 = sphi 0, %s119
    %s120 = sphi 0, %s117
    %s121 = sphi 0, %s120
    %s137 = sphi 0, %s121
  $region4: #{gemma_attention.3} parent=0 // loop_header_branch
    %11 = sbr.rel (%p9) target = $region8
  $region5: #{gemma_attention.3} parent=0 // loop_body
    %s13 = ssub.s32 %s8, 1
    %s14 = ssub.s32 %s8, 2
    %s30 = sadd.s32 1, %s19
    %p31 = scmp.ge.s32.totalorder %s30, 2
    %s32 = scalar_select %p31, 0, %s30
    %s33 = sadd.s32 1, %s18
    %s34 = scalar_select %p31, %s33, %s18
    %p35 = scmp.ge.s32.totalorder %s34, 1
    %s36 = scalar_select %p35, 0, %s34
    %s37 = sadd.s32 1, %s17
    %s38 = scalar_select %p35, %s37, %s17
    %p39 = scmp.ge.s32.totalorder %s38, 2
    %s40 = scalar_select %p39, 0, %s38
    %s41 = sadd.s32 1, %s16
    %s42 = scalar_select %p39, %s41, %s16
    %p43 = scmp.ge.s32.totalorder %s42, 4
    %s44 = scalar_select %p43, 0, %s42
    %s45 = sadd.s32 1, %s15
    %s46 = scalar_select %p43, %s45, %s15
    %p47 = scmp.ge.s32.totalorder %s46, 3
    %s48 = scalar_select %p47, 0, %s46
    %s49 = ssub.s32 %s17, %s40
    %s50 = ssub.s32 %s18, %s36
    %s51 = sor.u32 %s49, %s50
    %s52 = ssub.s32 %s19, %s32
    %s53 = sor.u32 %s51, %s52
    %p54 = scmp.eq.s32.totalorder %s53, 0
    %s56 = sadd.s32 %s55, 1
    %s57 = scalar_select %p54, %s55, %s56
    %p60 = pneg %p54
    %p61 = scmp.eq.s32.totalorder %s8, 47
    %p62 = por %p60, %p61
    %p63 = scmp.ne.s32.totalorder %s55, %s58
    %p64 = scmp.eq.s32.totalorder %s8, 0
    %p65 = por %p63, %p64
    %p66 = scmp.ne.s32.totalorder %s55, %s58
    %p67 = scmp.eq.s32.totalorder %s13, 47
    %p68 = por %p66, %p67
    %p69 = scmp.ne.s32.totalorder %s58, %s59
    %p70 = scmp.eq.s32.totalorder %s13, 0
    %p71 = por %p69, %p70
    %p72 = scmp.ne.s32.totalorder %s58, %s59
    %p73 = scmp.eq.s32.totalorder %s14, 47
    %p74 = por %p72, %p73
    %p76 = scmp.ne.s32.totalorder %s59, %s75
    %p77 = scmp.eq.s32.totalorder %s14, 0
    %p78 = por %p76, %p77
    %s79 = ssub.s32 %s15, %s48
    %s80 = ssub.s32 %s16, %s44
    %s81 = sor.u32 %s79, %s80
    %s82 = ssub.s32 %s19, %s32
    %s83 = sor.u32 %s81, %s82
    %p84 = scmp.eq.s32.totalorder %s83, 0
    %s86 = sadd.s32 %s85, 1
    %s87 = scalar_select %p84, %s85, %s86
    %p90 = pneg %p84
    %p91 = scmp.eq.s32.totalorder %s8, 47
    %p92 = por %p90, %p91
    %p93 = scmp.ne.s32.totalorder %s85, %s88
    %p94 = scmp.eq.s32.totalorder %s8, 0
    %p95 = por %p93, %p94
    %p96 = scmp.ne.s32.totalorder %s85, %s88
    %p97 = scmp.eq.s32.totalorder %s13, 47
    %p98 = por %p96, %p97
    %p99 = scmp.ne.s32.totalorder %s88, %s89
    %p100 = scmp.eq.s32.totalorder %s13, 0
    %p101 = por %p99, %p100
    %p102 = scmp.ne.s32.totalorder %s88, %s89
    %p103 = scmp.eq.s32.totalorder %s14, 47
    %p104 = por %p102, %p103
    %p106 = scmp.ne.s32.totalorder %s89, %s105
    %p107 = scmp.eq.s32.totalorder %s14, 0
    %p108 = por %p106, %p107
    %s109 = ssub.s32 %s15, %s48
    %s110 = ssub.s32 %s16, %s44
    %s111 = sor.u32 %s109, %s110
    %s112 = ssub.s32 %s17, %s40
    %s113 = sor.u32 %s111, %s112
    %s114 = ssub.s32 %s18, %s36
    %s115 = sor.u32 %s113, %s114
    %p116 = scmp.eq.s32.totalorder %s115, 0
    %s118 = sadd.s32 %s117, 1
    %s119 = scalar_select %p116, %s117, %s118
    %p122 = pneg %p116
    %p123 = scmp.eq.s32.totalorder %s8, 47
    %p124 = por %p122, %p123
    %p125 = scmp.ne.s32.totalorder %s117, %s120
    %p126 = scmp.eq.s32.totalorder %s8, 0
    %p127 = por %p125, %p126
    %p128 = scmp.ne.s32.totalorder %s117, %s120
    %p129 = scmp.eq.s32.totalorder %s13, 47
    %p130 = por %p128, %p129
    %p131 = scmp.ne.s32.totalorder %s120, %s121
    %p132 = scmp.eq.s32.totalorder %s13, 0
    %p133 = por %p131, %p132
    %p134 = scmp.ne.s32.totalorder %s120, %s121
    %p135 = scmp.eq.s32.totalorder %s14, 47
    %p136 = por %p134, %p135
    %p138 = scmp.ne.s32.totalorder %s121, %s137
    %p139 = scmp.eq.s32.totalorder %s14, 0
    %p140 = por %p138, %p139
    %p141 = scmp.le.s32.totalorder 1, %s8
    %p142 = scmp.lt.s32.totalorder %s8, 49
    %p143 = pnand %p141, %p142
    %p144 = pneg %p143
    // Predicated region
    $region9: #{gemma_attention.3} parent=5 // pred_check
      _
    $region10: #{gemma_attention.3} parent=5 // pred_check_branch
      %146 = sbr.rel (%p143) target = $region12
    $region11: #{gemma_attention.3} parent=5 // pred_region
      %s147 = ssub.s32 %s8, 1
    $region12: #{gemma_attention.3} parent=5 // pred_fallthru
      _
    %p148 = scmp.lt.s32.totalorder %s8, 48
    // Predicated region
    $region13: #{gemma_attention.3} parent=5 // pred_check
      %p149 = pneg %p148
    $region14: #{gemma_attention.3} parent=5 // pred_check_branch
      %151 = sbr.rel (%p149) target = $region16
    $region15: #{gemma_attention.3} parent=5 // pred_region
      // Predicated region
      $region17: #{gemma_attention.3} parent=15 // pred_check
        %p152 = pneg %p65
      $region18: #{gemma_attention.3} parent=15 // pred_check_branch
        %154 = sbr.rel (%p152) target = $region20
      $region19: #{gemma_attention.3} parent=15 // pred_region
        %s155 = smul.u32 4, %s19
        %p156 = scmp.lt.s32.totalorder %s17, 1
        %s157 = scalar_select %p156, %s17, 1
        %p158 = scmp.lt.s32.totalorder %s18, 0
        %s159 = scalar_select %p158, %s18, 0
        %p160 = scmp.lt.s32.totalorder %s155, 7
        %s161 = scalar_select %p160, %s155, 7
        %s162 = smul.addr %s159, 8
        %s163 = sadd.s32 %s161, %s162
        %s164 = smul.addr %s157, 8
        %s165 = sadd.s32 %s163, %s164
        %s166 = smul.addr %s165, 8
        %s167 = scalar_lea.vmem %s0, %s166
        %s168 = smul.u32 4, %s19
      $region20: #{gemma_attention.3} parent=15 // pred_fallthru
        _
      // Predicated region
      $region21: #{gemma_attention.3} parent=15 // pred_check
        %p169 = pneg %p95
      $region22: #{gemma_attention.3} parent=15 // pred_check_branch
        %171 = sbr.rel (%p169) target = $region24
      $region23: #{gemma_attention.3} parent=15 // pred_region
        %s172 = smul.u32 64, %s19
        %p173 = scmp.lt.s32.totalorder %s15, 2
        %s174 = scalar_select %p173, %s15, 2
        %p175 = scmp.lt.s32.totalorder %s16, 3
        %s176 = scalar_select %p175, %s16, 3
        %p177 = scmp.lt.s32.totalorder %s172, 127
        %s178 = scalar_select %p177, %s172, 127
        %s179 = smul.addr %s178, 2
        %s180 = smul.addr %s176, 256
        %s181 = sadd.s32 %s179, %s180
        %s182 = smul.addr %s174, 1024
        %s183 = sadd.s32 %s181, %s182
        %s184 = smul.addr %s183, 8
        %s185 = scalar_lea.vmem %s1, %s184
        %s186 = smul.u32 64, %s19
      $region24: #{gemma_attention.3} parent=15 // pred_fallthru
        _
    $region16: #{gemma_attention.3} parent=5 // pred_fallthru
      _
    %p187 = scmp.le.s32.totalorder 1, %s8
    %p188 = scmp.lt.s32.totalorder %s8, 49
    %p189 = pnand %p187, %p188
    %p190 = pneg %p189
    // Predicated region
    $region25: #{gemma_attention.3} parent=5 // pred_check
      _
    $region26: #{gemma_attention.3} parent=5 // pred_check_branch
      %192 = sbr.rel (%p189) target = $region28
    $region27: #{gemma_attention.3} parent=5 // pred_region
      %s193 = ssub.s32 %s8, 1
      %s194 = smul.u32 4, %s24
      %p195 = scmp.lt.s32.totalorder %s22, 1
      %s196 = scalar_select %p195, %s22, 1
      %p197 = scmp.lt.s32.totalorder %s23, 0
      %s198 = scalar_select %p197, %s23, 0
      %p199 = scmp.lt.s32.totalorder %s194, 7
      %s200 = scalar_select %p199, %s194, 7
      %s201 = smul.addr %s198, 8
      %s202 = sadd.s32 %s200, %s201
      %s203 = smul.addr %s196, 8
      %s204 = sadd.s32 %s202, %s203
      %s205 = smul.addr %s204, 8
      %s206 = scalar_lea.vmem %s0, %s205
      %p207 = pneg %p71
      %p208 = pneg %p68
      %s209 = smul.u32 64, %s24
      %p210 = scmp.lt.s32.totalorder %s20, 2
      %s211 = scalar_select %p210, %s20, 2
      %p212 = scmp.lt.s32.totalorder %s21, 3
      %s213 = scalar_select %p212, %s21, 3
      %p214 = scmp.lt.s32.totalorder %s209, 127
      %s215 = scalar_select %p214, %s209, 127
      %s216 = smul.addr %s215, 2
      %s217 = smul.addr %s213, 256
      %s218 = sadd.s32 %s216, %s217
      %s219 = smul.addr %s211, 1024
      %s220 = sadd.s32 %s218, %s219
      %s221 = smul.addr %s220, 8
      %s222 = scalar_lea.vmem %s1, %s221
      %p223 = pneg %p101
      %p224 = pneg %p98
      %p225 = pneg %p133
      %p226 = pneg %p130
      %p227 = scmp.lt.s32.totalorder %s20, 2
      %s228 = scalar_select %p227, %s20, 2
      %p229 = scmp.lt.s32.totalorder %s21, 3
      %s230 = scalar_select %p229, %s21, 3
      %p231 = scmp.lt.s32.totalorder %s22, 1
      %s232 = scalar_select %p231, %s22, 1
      %p233 = scmp.lt.s32.totalorder %s23, 0
      %s234 = scalar_select %p233, %s23, 0
      %s235 = smul.addr %s234, 2
      %s236 = smul.addr %s232, 2
      %s237 = sadd.s32 %s235, %s236
      %s238 = smul.addr %s230, 4
      %s239 = sadd.s32 %s237, %s238
      %s240 = smul.addr %s228, 16
      %s241 = sadd.s32 %s239, %s240
      %s242 = smul.addr %s241, 8
      %s243 = scalar_lea.vmem %s2, %s242
      %s244 = smul.u32 4, %s24
      %p245 = scmp.lt.s32.totalorder %s22, 1
      %s246 = scalar_select %p245, %s22, 1
      %p247 = scmp.lt.s32.totalorder %s23, 0
      %s248 = scalar_select %p247, %s23, 0
      %p249 = scmp.lt.s32.totalorder %s244, 7
      %s250 = scalar_select %p249, %s244, 7
      %s251 = smul.addr %s248, 8
      %s252 = sadd.s32 %s250, %s251
      %s253 = smul.addr %s246, 8
      %s254 = sadd.s32 %s252, %s253
      %s255 = smul.addr %s254, 8
      %s256 = scalar_lea.vmem %s0, %s255
      %s257 = smul.u32 4, %s24
      %s258 = smul.u32 64, %s24
      %p259 = scmp.lt.s32.totalorder %s20, 2
      %s260 = scalar_select %p259, %s20, 2
      %p261 = scmp.lt.s32.totalorder %s21, 3
      %s262 = scalar_select %p261, %s21, 3
      %p263 = scmp.lt.s32.totalorder %s258, 127
      %s264 = scalar_select %p263, %s258, 127
      %s265 = smul.addr %s264, 2
      %s266 = smul.addr %s262, 256
      %s267 = sadd.s32 %s265, %s266
      %s268 = smul.addr %s260, 1024
      %s269 = sadd.s32 %s267, %s268
      %s270 = smul.addr %s269, 8
      %s271 = scalar_lea.vmem %s1, %s270
      %s272 = smul.u32 64, %s24
      %p273 = scmp.lt.s32.totalorder %s20, 2
      %s274 = scalar_select %p273, %s20, 2
      %p275 = scmp.lt.s32.totalorder %s21, 3
      %s276 = scalar_select %p275, %s21, 3
      %p277 = scmp.lt.s32.totalorder %s22, 1
      %s278 = scalar_select %p277, %s22, 1
      %p279 = scmp.lt.s32.totalorder %s23, 0
      %s280 = scalar_select %p279, %s23, 0
      %s281 = smul.addr %s280, 2
      %s282 = smul.addr %s278, 2
      %s283 = sadd.s32 %s281, %s282
      %s284 = smul.addr %s276, 4
      %s285 = sadd.s32 %s283, %s284
      %s286 = smul.addr %s274, 16
      %s287 = sadd.s32 %s285, %s286
      %s288 = smul.addr %s287, 8
      %s289 = scalar_lea.vmem %s2, %s288
      %p290 = scmp.eq.s32.totalorder %s24, 0
      // Predicated region
      $region29: #{gemma_attention.3} parent=27 // pred_check
        %p291 = pneg %p290
      $region30: #{gemma_attention.3} parent=27 // pred_check_branch
        %293 = sbr.rel (%p291) target = $region32
      $region31: #{gemma_attention.3} parent=27 // pred_region
        %294 = vst [vmem:[#allocation2] sm:$0xff] 0.0
        %295 = vst [vmem:[#allocation2 + $0x8] sm:$0xff] 0.0
      $region32: #{gemma_attention.3} parent=27 // pred_fallthru
        _
      %v296 = vld [vmem:[#allocation2] sm:$0xff]
      %v297 = vld [vmem:[#allocation2 + $0x8] sm:$0xff]
      %v298 = vld [vmem:[%s256] sm:$0xff]
      %v299 = vld [vmem:[%s256 + $0x8] sm:$0xff]
      %v300 = vld [vmem:[%s256 + $0x10] sm:$0xff]
      %v301 = vld [vmem:[%s256 + $0x18] sm:$0xff]
      %v302 = vld [vmem:[%s271] sm:$0xff]
      %v303 = vld [vmem:[%s271 + $0x8] sm:$0xff]
      %v304 = vld [vmem:[%s271 + $0x10] sm:$0xff]
      %v305 = vld [vmem:[%s271 + $0x18] sm:$0xff]
      %v306 = vld [vmem:[%s271 + $0x20] sm:$0xff]
      %v307 = vld [vmem:[%s271 + $0x28] sm:$0xff]
      %v308 = vld [vmem:[%s271 + $0x30] sm:$0xff]
      %v309 = vld [vmem:[%s271 + $0x38] sm:$0xff]
      %v310 = vld [vmem:[%s271 + $0x40] sm:$0xff]
      %v311 = vld [vmem:[%s271 + $0x48] sm:$0xff]
      %v312 = vld [vmem:[%s271 + $0x50] sm:$0xff]
      %v313 = vld [vmem:[%s271 + $0x58] sm:$0xff]
      %v314 = vld [vmem:[%s271 + $0x60] sm:$0xff]
      %v315 = vld [vmem:[%s271 + $0x68] sm:$0xff]
      %v316 = vld [vmem:[%s271 + $0x70] sm:$0xff]
      %v317 = vld [vmem:[%s271 + $0x78] sm:$0xff]
      %v318 = vld [vmem:[%s271 + $0x80] sm:$0xff]
      %v319 = vld [vmem:[%s271 + $0x88] sm:$0xff]
      %v320 = vld [vmem:[%s271 + $0x90] sm:$0xff]
      %v321 = vld [vmem:[%s271 + $0x98] sm:$0xff]
      %v322 = vld [vmem:[%s271 + $0xa0] sm:$0xff]
      %v323 = vld [vmem:[%s271 + $0xa8] sm:$0xff]
      %v324 = vld [vmem:[%s271 + $0xb0] sm:$0xff]
      %v325 = vld [vmem:[%s271 + $0xb8] sm:$0xff]
      %v326 = vld [vmem:[%s271 + $0xc0] sm:$0xff]
      %v327 = vld [vmem:[%s271 + $0xc8] sm:$0xff]
      %v328 = vld [vmem:[%s271 + $0xd0] sm:$0xff]
      %v329 = vld [vmem:[%s271 + $0xd8] sm:$0xff]
      %v330 = vld [vmem:[%s271 + $0xe0] sm:$0xff]
      %v331 = vld [vmem:[%s271 + $0xe8] sm:$0xff]
      %v332 = vld [vmem:[%s271 + $0xf0] sm:$0xff]
      %v333 = vld [vmem:[%s271 + $0xf8] sm:$0xff]
      %v334 = vld [vmem:[%s271 + $0x100] sm:$0xff]
      %v335 = vld [vmem:[%s271 + $0x108] sm:$0xff]
      %v336 = vld [vmem:[%s271 + $0x110] sm:$0xff]
      %v337 = vld [vmem:[%s271 + $0x118] sm:$0xff]
      %v338 = vld [vmem:[%s271 + $0x120] sm:$0xff]
      %v339 = vld [vmem:[%s271 + $0x128] sm:$0xff]
      %v340 = vld [vmem:[%s271 + $0x130] sm:$0xff]
      %v341 = vld [vmem:[%s271 + $0x138] sm:$0xff]
      %v342 = vld [vmem:[%s271 + $0x140] sm:$0xff]
      %v343 = vld [vmem:[%s271 + $0x148] sm:$0xff]
      %v344 = vld [vmem:[%s271 + $0x150] sm:$0xff]
      %v345 = vld [vmem:[%s271 + $0x158] sm:$0xff]
      %v346 = vld [vmem:[%s271 + $0x160] sm:$0xff]
      %v347 = vld [vmem:[%s271 + $0x168] sm:$0xff]
      %v348 = vld [vmem:[%s271 + $0x170] sm:$0xff]
      %v349 = vld [vmem:[%s271 + $0x178] sm:$0xff]
      %v350 = vld [vmem:[%s271 + $0x180] sm:$0xff]
      %v351 = vld [vmem:[%s271 + $0x188] sm:$0xff]
      %v352 = vld [vmem:[%s271 + $0x190] sm:$0xff]
      %v353 = vld [vmem:[%s271 + $0x198] sm:$0xff]
      %v354 = vld [vmem:[%s271 + $0x1a0] sm:$0xff]
      %v355 = vld [vmem:[%s271 + $0x1a8] sm:$0xff]
      %v356 = vld [vmem:[%s271 + $0x1b0] sm:$0xff]
      %v357 = vld [vmem:[%s271 + $0x1b8] sm:$0xff]
      %v358 = vld [vmem:[%s271 + $0x1c0] sm:$0xff]
      %v359 = vld [vmem:[%s271 + $0x1c8] sm:$0xff]
      %v360 = vld [vmem:[%s271 + $0x1d0] sm:$0xff]
      %v361 = vld [vmem:[%s271 + $0x1d8] sm:$0xff]
      %v362 = vld [vmem:[%s271 + $0x1e0] sm:$0xff]
      %v363 = vld [vmem:[%s271 + $0x1e8] sm:$0xff]
      %v364 = vld [vmem:[%s271 + $0x1f0] sm:$0xff]
      %v365 = vld [vmem:[%s271 + $0x1f8] sm:$0xff]
      %v366 = vld [vmem:[%s271 + $0x200] sm:$0xff]
      %v367 = vld [vmem:[%s271 + $0x208] sm:$0xff]
      %v368 = vld [vmem:[%s271 + $0x210] sm:$0xff]
      %v369 = vld [vmem:[%s271 + $0x218] sm:$0xff]
      %v370 = vld [vmem:[%s271 + $0x220] sm:$0xff]
      %v371 = vld [vmem:[%s271 + $0x228] sm:$0xff]
      %v372 = vld [vmem:[%s271 + $0x230] sm:$0xff]
      %v373 = vld [vmem:[%s271 + $0x238] sm:$0xff]
      %v374 = vld [vmem:[%s271 + $0x240] sm:$0xff]
      %v375 = vld [vmem:[%s271 + $0x248] sm:$0xff]
      %v376 = vld [vmem:[%s271 + $0x250] sm:$0xff]
      %v377 = vld [vmem:[%s271 + $0x258] sm:$0xff]
      %v378 = vld [vmem:[%s271 + $0x260] sm:$0xff]
      %v379 = vld [vmem:[%s271 + $0x268] sm:$0xff]
      %v380 = vld [vmem:[%s271 + $0x270] sm:$0xff]
      %v381 = vld [vmem:[%s271 + $0x278] sm:$0xff]
      %v382 = vld [vmem:[%s271 + $0x280] sm:$0xff]
      %v383 = vld [vmem:[%s271 + $0x288] sm:$0xff]
      %v384 = vld [vmem:[%s271 + $0x290] sm:$0xff]
      %v385 = vld [vmem:[%s271 + $0x298] sm:$0xff]
      %v386 = vld [vmem:[%s271 + $0x2a0] sm:$0xff]
      %v387 = vld [vmem:[%s271 + $0x2a8] sm:$0xff]
      %v388 = vld [vmem:[%s271 + $0x2b0] sm:$0xff]
      %v389 = vld [vmem:[%s271 + $0x2b8] sm:$0xff]
      %v390 = vld [vmem:[%s271 + $0x2c0] sm:$0xff]
      %v391 = vld [vmem:[%s271 + $0x2c8] sm:$0xff]
      %v392 = vld [vmem:[%s271 + $0x2d0] sm:$0xff]
      %v393 = vld [vmem:[%s271 + $0x2d8] sm:$0xff]
      %v394 = vld [vmem:[%s271 + $0x2e0] sm:$0xff]
      %v395 = vld [vmem:[%s271 + $0x2e8] sm:$0xff]
      %v396 = vld [vmem:[%s271 + $0x2f0] sm:$0xff]
      %v397 = vld [vmem:[%s271 + $0x2f8] sm:$0xff]
      %v398 = vld [vmem:[%s271 + $0x300] sm:$0xff]
      %v399 = vld [vmem:[%s271 + $0x308] sm:$0xff]
      %v400 = vld [vmem:[%s271 + $0x310] sm:$0xff]
      %v401 = vld [vmem:[%s271 + $0x318] sm:$0xff]
      %v402 = vld [vmem:[%s271 + $0x320] sm:$0xff]
      %v403 = vld [vmem:[%s271 + $0x328] sm:$0xff]
      %v404 = vld [vmem:[%s271 + $0x330] sm:$0xff]
      %v405 = vld [vmem:[%s271 + $0x338] sm:$0xff]
      %v406 = vld [vmem:[%s271 + $0x340] sm:$0xff]
      %v407 = vld [vmem:[%s271 + $0x348] sm:$0xff]
      %v408 = vld [vmem:[%s271 + $0x350] sm:$0xff]
      %v409 = vld [vmem:[%s271 + $0x358] sm:$0xff]
      %v410 = vld [vmem:[%s271 + $0x360] sm:$0xff]
      %v411 = vld [vmem:[%s271 + $0x368] sm:$0xff]
      %v412 = vld [vmem:[%s271 + $0x370] sm:$0xff]
      %v413 = vld [vmem:[%s271 + $0x378] sm:$0xff]
      %v414 = vld [vmem:[%s271 + $0x380] sm:$0xff]
      %v415 = vld [vmem:[%s271 + $0x388] sm:$0xff]
      %v416 = vld [vmem:[%s271 + $0x390] sm:$0xff]
      %v417 = vld [vmem:[%s271 + $0x398] sm:$0xff]
      %v418 = vld [vmem:[%s271 + $0x3a0] sm:$0xff]
      %v419 = vld [vmem:[%s271 + $0x3a8] sm:$0xff]
      %v420 = vld [vmem:[%s271 + $0x3b0] sm:$0xff]
      %v421 = vld [vmem:[%s271 + $0x3b8] sm:$0xff]
      %v422 = vld [vmem:[%s271 + $0x3c0] sm:$0xff]
      %v423 = vld [vmem:[%s271 + $0x3c8] sm:$0xff]
      %v424 = vld [vmem:[%s271 + $0x3d0] sm:$0xff]
      %v425 = vld [vmem:[%s271 + $0x3d8] sm:$0xff]
      %v426 = vld [vmem:[%s271 + $0x3e0] sm:$0xff]
      %v427 = vld [vmem:[%s271 + $0x3e8] sm:$0xff]
      %v428 = vld [vmem:[%s271 + $0x3f0] sm:$0xff]
      %v429 = vld [vmem:[%s271 + $0x3f8] sm:$0xff]
      %430 = vmatprep.subr.mxu0 %v303
      %431 = vmatpush1.msra.mxu0 %v302
      %432 = vmatprep.subr.mxu0 %v305
      %433 = vmatpush1.msra.mxu0 %v304
      %434 = vmatprep.subr.mxu0 %v307
      %435 = vmatpush1.msra.mxu0 %v306
      %436 = vmatprep.subr.mxu0 %v309
      %437 = vmatpush1.msra.mxu0 %v308
      %438 = vmatprep.subr.mxu0 %v311
      %439 = vmatpush1.msra.mxu0 %v310
      %440 = vmatprep.subr.mxu0 %v313
      %441 = vmatpush1.msra.mxu0 %v312
      %442 = vmatprep.subr.mxu0 %v315
      %443 = vmatpush1.msra.mxu0 %v314
      %444 = vmatprep.subr.mxu0 %v317
      %445 = vmatpush1.msra.mxu0 %v316
      %446 = vmatprep.subr.mxu0 %v319
      %447 = vmatpush1.msra.mxu0 %v318
      %448 = vmatprep.subr.mxu0 %v321
      %449 = vmatpush1.msra.mxu0 %v320
      %450 = vmatprep.subr.mxu0 %v323
      %451 = vmatpush1.msra.mxu0 %v322
      %452 = vmatprep.subr.mxu0 %v325
      %453 = vmatpush1.msra.mxu0 %v324
      %454 = vmatprep.subr.mxu0 %v327
      %455 = vmatpush1.msra.mxu0 %v326
      %456 = vmatprep.subr.mxu0 %v329
      %457 = vmatpush1.msra.mxu0 %v328
      %458 = vmatprep.subr.mxu0 %v331
      %459 = vmatpush1.msra.mxu0 %v330
      %460 = vmatprep.subr.mxu0 %v333
      %461 = vmatpush1.msra.mxu0 %v332
      %462 = vmatprep.subr.mxu0 %v335
      %463 = vmatpush1.msra.mxu0 %v334
      %464 = vmatprep.subr.mxu0 %v337
      %465 = vmatpush1.msra.mxu0 %v336
      %466 = vmatprep.subr.mxu0 %v339
      %467 = vmatpush1.msra.mxu0 %v338
      %468 = vmatprep.subr.mxu0 %v341
      %469 = vmatpush1.msra.mxu0 %v340
      %470 = vmatprep.subr.mxu0 %v343
      %471 = vmatpush1.msra.mxu0 %v342
      %472 = vmatprep.subr.mxu0 %v345
      %473 = vmatpush1.msra.mxu0 %v344
      %474 = vmatprep.subr.mxu0 %v347
      %475 = vmatpush1.msra.mxu0 %v346
      %476 = vmatprep.subr.mxu0 %v349
      %477 = vmatpush1.msra.mxu0 %v348
      %478 = vmatprep.subr.mxu0 %v351
      %479 = vmatpush1.msra.mxu0 %v350
      %480 = vmatprep.subr.mxu0 %v353
      %481 = vmatpush1.msra.mxu0 %v352
      %482 = vmatprep.subr.mxu0 %v355
      %483 = vmatpush1.msra.mxu0 %v354
      %484 = vmatprep.subr.mxu0 %v357
      %485 = vmatpush1.msra.mxu0 %v356
      %486 = vmatprep.subr.mxu0 %v359
      %487 = vmatpush1.msra.mxu0 %v358
      %488 = vmatprep.subr.mxu0 %v361
      %489 = vmatpush1.msra.mxu0 %v360
      %490 = vmatprep.subr.mxu0 %v363
      %491 = vmatpush1.msra.mxu0 %v362
      %492 = vmatprep.subr.mxu0 %v365
      %493 = vmatpush1.msra.mxu0 %v364
      %494 = vmatprep.mubr.f32.mxu0 %v299
      %495 = vmatmul.mubr.f32.gmra.mrb[0].mxu0 %v298
      %v496 = vpop.f32.mrb[0].mxu0
      %v497 = vadd.f32 0.0, %v496
      %v498 = vpop.f32.mrb[0].mxu0
      %v499 = vadd.f32 0.0, %v498
      %500 = vdwg.mxu0
      %501 = vmatprep.subr.mxu0 %v367
      %502 = vmatpush1.msra.mxu0 %v366
      %503 = vmatprep.subr.mxu0 %v369
      %504 = vmatpush1.msra.mxu0 %v368
      %505 = vmatprep.subr.mxu0 %v371
      %506 = vmatpush1.msra.mxu0 %v370
      %507 = vmatprep.subr.mxu0 %v373
      %508 = vmatpush1.msra.mxu0 %v372
      %509 = vmatprep.subr.mxu0 %v375
      %510 = vmatpush1.msra.mxu0 %v374
      %511 = vmatprep.subr.mxu0 %v377
      %512 = vmatpush1.msra.mxu0 %v376
      %513 = vmatprep.subr.mxu0 %v379
      %514 = vmatpush1.msra.mxu0 %v378
      %515 = vmatprep.subr.mxu0 %v381
      %516 = vmatpush1.msra.mxu0 %v380
      %517 = vmatprep.subr.mxu0 %v383
      %518 = vmatpush1.msra.mxu0 %v382
      %519 = vmatprep.subr.mxu0 %v385
      %520 = vmatpush1.msra.mxu0 %v384
      %521 = vmatprep.subr.mxu0 %v387
      %522 = vmatpush1.msra.mxu0 %v386
      %523 = vmatprep.subr.mxu0 %v389
      %524 = vmatpush1.msra.mxu0 %v388
      %525 = vmatprep.subr.mxu0 %v391
      %526 = vmatpush1.msra.mxu0 %v390
      %527 = vmatprep.subr.mxu0 %v393
      %528 = vmatpush1.msra.mxu0 %v392
      %529 = vmatprep.subr.mxu0 %v395
      %530 = vmatpush1.msra.mxu0 %v394
      %531 = vmatprep.subr.mxu0 %v397
      %532 = vmatpush1.msra.mxu0 %v396
      %533 = vmatprep.subr.mxu0 %v399
      %534 = vmatpush1.msra.mxu0 %v398
      %535 = vmatprep.subr.mxu0 %v401
      %536 = vmatpush1.msra.mxu0 %v400
      %537 = vmatprep.subr.mxu0 %v403
      %538 = vmatpush1.msra.mxu0 %v402
      %539 = vmatprep.subr.mxu0 %v405
      %540 = vmatpush1.msra.mxu0 %v404
      %541 = vmatprep.subr.mxu0 %v407
      %542 = vmatpush1.msra.mxu0 %v406
      %543 = vmatprep.subr.mxu0 %v409
      %544 = vmatpush1.msra.mxu0 %v408
      %545 = vmatprep.subr.mxu0 %v411
      %546 = vmatpush1.msra.mxu0 %v410
      %547 = vmatprep.subr.mxu0 %v413
      %548 = vmatpush1.msra.mxu0 %v412
      %549 = vmatprep.subr.mxu0 %v415
      %550 = vmatpush1.msra.mxu0 %v414
      %551 = vmatprep.subr.mxu0 %v417
      %552 = vmatpush1.msra.mxu0 %v416
      %553 = vmatprep.subr.mxu0 %v419
      %554 = vmatpush1.msra.mxu0 %v418
      %555 = vmatprep.subr.mxu0 %v421
      %556 = vmatpush1.msra.mxu0 %v420
      %557 = vmatprep.subr.mxu0 %v423
      %558 = vmatpush1.msra.mxu0 %v422
      %559 = vmatprep.subr.mxu0 %v425
      %560 = vmatpush1.msra.mxu0 %v424
      %561 = vmatprep.subr.mxu0 %v427
      %562 = vmatpush1.msra.mxu0 %v426
      %563 = vmatprep.subr.mxu0 %v429
      %564 = vmatpush1.msra.mxu0 %v428
      %565 = vmatprep.mubr.f32.mxu0 %v301
      %566 = vmatmul.mubr.f32.gmra.mrb[0].mxu0 %v300
      %v567 = vpop.f32.mrb[0].mxu0
      %v568 = vadd.f32 %v497, %v567
      %v569 = vpop.f32.mrb[0].mxu0
      %v570 = vadd.f32 %v499, %v569
      %571 = vdwg.mxu0
      %v572 = vadd.f32 %v296, %v568
      %v573 = vadd.f32 %v297, %v570
      %574 = vst [vmem:[#allocation2] sm:$0xff] %v572
      %575 = vst [vmem:[#allocation2 + $0x8] sm:$0xff] %v573
      %p576 = scmp.eq.s32.totalorder %s24, 1
      // Predicated region
      $region33: #{gemma_attention.3} parent=27 // pred_check
        %p577 = pneg %p576
      $region34: #{gemma_attention.3} parent=27 // pred_check_branch
        %579 = sbr.rel (%p577) target = $region36
      $region35: #{gemma_attention.3} parent=27 // pred_region
        %v580 = vld [vmem:[#allocation2] sm:$0xff]
        %v581 = vld [vmem:[#allocation2 + $0x8] sm:$0xff]
        %582 = vst [vmem:[%s289] sm:$0xff] %v580
        %583 = vst [vmem:[%s289 + $0x8] sm:$0xff] %v581
      $region36: #{gemma_attention.3} parent=27 // pred_fallthru
        _
      %p584 = scmp.lt.s32.totalorder %s20, 2
      %s585 = scalar_select %p584, %s20, 2
      %p586 = scmp.lt.s32.totalorder %s21, 3
      %s587 = scalar_select %p586, %s21, 3
      %p588 = scmp.lt.s32.totalorder %s22, 1
      %s589 = scalar_select %p588, %s22, 1
      %p590 = scmp.lt.s32.totalorder %s23, 0
      %s591 = scalar_select %p590, %s23, 0
      %s592 = smul.addr %s591, 2
      %s593 = smul.addr %s589, 2
      %s594 = sadd.s32 %s592, %s593
      %s595 = smul.addr %s587, 4
      %s596 = sadd.s32 %s594, %s595
      %s597 = smul.addr %s585, 16
      %s598 = sadd.s32 %s596, %s597
      %s599 = smul.addr %s598, 8
      %s600 = scalar_lea.vmem %s2, %s599
      // Predicated region
      $region37: #{gemma_attention.3} parent=27 // pred_check
        %p601 = pneg %p130
      $region38: #{gemma_attention.3} parent=27 // pred_check_branch
        %603 = sbr.rel (%p601) target = $region40
      $region39: #{gemma_attention.3} parent=27 // pred_region
        _
      $region40: #{gemma_attention.3} parent=27 // pred_fallthru
        _
    $region28: #{gemma_attention.3} parent=5 // pred_fallthru
      _
    %p604 = scmp.le.s32.totalorder 2, %s8
    // Predicated region
    $region41: #{gemma_attention.3} parent=5 // pred_check
      %p605 = pneg %p604
    $region42: #{gemma_attention.3} parent=5 // pred_check_branch
      %607 = sbr.rel (%p605) target = $region44
    $region43: #{gemma_attention.3} parent=5 // pred_region
      %s608 = ssub.s32 %s8, 2
      // Predicated region
      $region45: #{gemma_attention.3} parent=43 // pred_check
        %p609 = pneg %p136
      $region46: #{gemma_attention.3} parent=43 // pred_check_branch
        %611 = sbr.rel (%p609) target = $region48
      $region47: #{gemma_attention.3} parent=43 // pred_region
        %p612 = scmp.lt.s32.totalorder %s25, 2
        %s613 = scalar_select %p612, %s25, 2
        %p614 = scmp.lt.s32.totalorder %s26, 3
        %s615 = scalar_select %p614, %s26, 3
        %p616 = scmp.lt.s32.totalorder %s27, 1
        %s617 = scalar_select %p616, %s27, 1
        %p618 = scmp.lt.s32.totalorder %s28, 0
        %s619 = scalar_select %p618, %s28, 0
        %s620 = smul.addr %s619, 2
        %s621 = smul.addr %s617, 2
        %s622 = sadd.s32 %s620, %s621
        %s623 = smul.addr %s615, 4
        %s624 = sadd.s32 %s622, %s623
        %s625 = smul.addr %s613, 16
        %s626 = sadd.s32 %s624, %s625
        %s627 = smul.addr %s626, 8
        %s628 = scalar_lea.vmem %s2, %s627
      $region48: #{gemma_attention.3} parent=43 // pred_fallthru
        _
    $region44: #{gemma_attention.3} parent=5 // pred_fallthru
      _
  $region6: #{gemma_attention.3} parent=0 // loop_footer
    %s12 = sadd.s32 1, %s8
  $region7: #{gemma_attention.3} parent=0 // loop_footer_branch
    %7 = sbr.rel target = $region3
  $region8: #{gemma_attention.3} parent=0 // loop_exit
    _

// kernel: gemma_attention.5
$region0: #{gemma_attention.5}
  #allocation0 [shape = 'u32[]', space=smem, size = 0x4, offset = 0x4, fixed_abs, tag = 'smem constant byte address 0x4 - core index']
  #allocation1 [shape = 'u32[144,128]{1,0:T(1,128)}', space=vmem, size = 0x12000, scoped, tag = 'internal scratch']
  #allocation2 [shape = 'f32[8,512]{1,0:T(8,128)}', space=vmem, size = 0x4000, scoped, tag = 'scratch operand']
  %s0 = inlined_call_operand.vmem [shape: f32[4,2,8,256], index: 0, kind: input, shape index: {}]
  %s1 = inlined_call_operand.vmem [shape: f32[4,256,1024], index: 1, kind: input, shape index: {}]
  %s2 = inlined_call_operand.hbm [shape: f32[2,8,1024], index: 2, kind: output, shape index: {}]
  %s3 = sld [smem:[#allocation0]]
  $region72: #{gemma_attention.5} parent=0
    _
  %s5 = ssub.s32 1, %s3
  %s6 = scalar_select 0, %s5, %s3
  $region1: #{gemma_attention.5} parent=0
    #allocation3 [shape = 'u8[1048576]{0}', space=vmem, size = 0x100000, scoped, tag = 'input window, operand 1']
    #allocation4 [shape = 'u8[32768]{0}', space=vmem, size = 0x8000, scoped, tag = 'output window, operand 0']
    #allocation5 [shape = 's32[2]{0}', space=sflag, size = 0x8, scoped, tag = 'scoped memory for gemma_attention.5']
    %7 = vsyncpa [#allocation5], 0
    %s8 = scalar_lea.sflag [#allocation5], 1
    %9 = vsyncpa %s8, 0
    loop: start=0, step=1, limit=18
    $region2: #{gemma_attention.5} parent=1 // loop_pre_header
      _
    $region3: #{gemma_attention.5} parent=1 // loop_header
      %s11 = sphi 0, %s15
      %p12 = scmp.ge.s32.totalorder %s11, 18
      %s18 = sphi 0, %s44
      %s19 = sphi 0, %s40
      %s20 = sphi 0, %s36
      %s21 = sphi 0, %s32
      %s22 = sphi 0, %s18
      %s23 = sphi 0, %s19
      %s24 = sphi 0, %s20
      %s25 = sphi 0, %s21
      %s26 = sphi 0, %s22
      %s27 = sphi 0, %s23
      %s28 = sphi 0, %s24
      %s29 = sphi 0, %s25
      %s51 = sphi 0, %s53
      %s54 = sphi 0, %s51
      %s55 = sphi 0, %s54
      %s71 = sphi 0, %s55
      %s79 = sphi 0, %s81
      %s82 = sphi 0, %s79
      %s83 = sphi 0, %s82
      %s99 = sphi 0, %s83
      %s109 = sphi 0, %s111
      %s112 = sphi 0, %s109
      %s113 = sphi 0, %s112
      %s129 = sphi 0, %s113
    $region4: #{gemma_attention.5} parent=1 // loop_header_branch
      %14 = sbr.rel (%p12) target = $region8
    $region5: #{gemma_attention.5} parent=1 // loop_body
      %s16 = ssub.s32 %s11, 1
      %s17 = ssub.s32 %s11, 2
      %s30 = sadd.s32 1, %s21
      %p31 = scmp.ge.s32.totalorder %s30, 4
      %s32 = scalar_select %p31, 0, %s30
      %s33 = sadd.s32 1, %s20
      %s34 = scalar_select %p31, %s33, %s20
      %p35 = scmp.ge.s32.totalorder %s34, 2
      %s36 = scalar_select %p35, 0, %s34
      %s37 = sadd.s32 1, %s19
      %s38 = scalar_select %p35, %s37, %s19
      %p39 = scmp.ge.s32.totalorder %s38, 1
      %s40 = scalar_select %p39, 0, %s38
      %s41 = sadd.s32 1, %s18
      %s42 = scalar_select %p39, %s41, %s18
      %p43 = scmp.ge.s32.totalorder %s42, 2
      %s44 = scalar_select %p43, 0, %s42
      %s45 = ssub.s32 %s21, %s32
      %s46 = ssub.s32 %s18, %s44
      %s47 = sor.u32 %s45, %s46
      %s48 = ssub.s32 %s19, %s40
      %s49 = sor.u32 %s47, %s48
      %p50 = scmp.eq.s32.totalorder %s49, 0
      %s52 = sadd.s32 %s51, 1
      %s53 = scalar_select %p50, %s51, %s52
      %p56 = pneg %p50
      %p57 = scmp.eq.s32.totalorder %s11, 15
      %p58 = por %p56, %p57
      %p59 = scmp.ne.s32.totalorder %s51, %s54
      %p60 = scmp.eq.s32.totalorder %s11, 0
      %p61 = por %p59, %p60
      %p62 = scmp.ne.s32.totalorder %s51, %s54
      %p63 = scmp.eq.s32.totalorder %s16, 15
      %p64 = por %p62, %p63
      %p65 = scmp.ne.s32.totalorder %s54, %s55
      %p66 = scmp.eq.s32.totalorder %s16, 0
      %p67 = por %p65, %p66
      %p68 = scmp.ne.s32.totalorder %s54, %s55
      %p69 = scmp.eq.s32.totalorder %s17, 15
      %p70 = por %p68, %p69
      %p72 = scmp.ne.s32.totalorder %s55, %s71
      %p73 = scmp.eq.s32.totalorder %s17, 0
      %p74 = por %p72, %p73
      %s75 = ssub.s32 %s21, %s32
      %s76 = ssub.s32 %s20, %s36
      %s77 = sor.u32 %s75, %s76
      %p78 = scmp.eq.s32.totalorder %s77, 0
      %s80 = sadd.s32 %s79, 1
      %s81 = scalar_select %p78, %s79, %s80
      %p84 = pneg %p78
      %p85 = scmp.eq.s32.totalorder %s11, 15
      %p86 = por %p84, %p85
      %p87 = scmp.ne.s32.totalorder %s79, %s82
      %p88 = scmp.eq.s32.totalorder %s11, 0
      %p89 = por %p87, %p88
      %p90 = scmp.ne.s32.totalorder %s79, %s82
      %p91 = scmp.eq.s32.totalorder %s16, 15
      %p92 = por %p90, %p91
      %p93 = scmp.ne.s32.totalorder %s82, %s83
      %p94 = scmp.eq.s32.totalorder %s16, 0
      %p95 = por %p93, %p94
      %p96 = scmp.ne.s32.totalorder %s82, %s83
      %p97 = scmp.eq.s32.totalorder %s17, 15
      %p98 = por %p96, %p97
      %p100 = scmp.ne.s32.totalorder %s83, %s99
      %p101 = scmp.eq.s32.totalorder %s17, 0
      %p102 = por %p100, %p101
      %s103 = ssub.s32 %s18, %s44
      %s104 = ssub.s32 %s19, %s40
      %s105 = sor.u32 %s103, %s104
      %s106 = ssub.s32 %s20, %s36
      %s107 = sor.u32 %s105, %s106
      %p108 = scmp.eq.s32.totalorder %s107, 0
      %s110 = sadd.s32 %s109, 1
      %s111 = scalar_select %p108, %s109, %s110
      %p114 = pneg %p108
      %p115 = scmp.eq.s32.totalorder %s11, 15
      %p116 = por %p114, %p115
      %p117 = scmp.ne.s32.totalorder %s109, %s112
      %p118 = scmp.eq.s32.totalorder %s11, 0
      %p119 = por %p117, %p118
      %p120 = scmp.ne.s32.totalorder %s109, %s112
      %p121 = scmp.eq.s32.totalorder %s16, 15
      %p122 = por %p120, %p121
      %p123 = scmp.ne.s32.totalorder %s112, %s113
      %p124 = scmp.eq.s32.totalorder %s16, 0
      %p125 = por %p123, %p124
      %p126 = scmp.ne.s32.totalorder %s112, %s113
      %p127 = scmp.eq.s32.totalorder %s17, 15
      %p128 = por %p126, %p127
      %p130 = scmp.ne.s32.totalorder %s113, %s129
      %p131 = scmp.eq.s32.totalorder %s17, 0
      %p132 = por %p130, %p131
      %p133 = scmp.le.s32.totalorder 1, %s11
      %p134 = scmp.lt.s32.totalorder %s11, 17
      %p135 = pnand %p133, %p134
      %p136 = pneg %p135
      // Predicated region
      $region9: #{gemma_attention.5} parent=5 // pred_check
        _
      $region10: #{gemma_attention.5} parent=5 // pred_check_branch
        %138 = sbr.rel (%p135) target = $region12
      $region11: #{gemma_attention.5} parent=5 // pred_region
        %s139 = ssub.s32 %s11, 1
      $region12: #{gemma_attention.5} parent=5 // pred_fallthru
        _
      %p140 = scmp.lt.s32.totalorder %s11, 16
      // Predicated region
      $region13: #{gemma_attention.5} parent=5 // pred_check
        %p141 = pneg %p140
      $region14: #{gemma_attention.5} parent=5 // pred_check_branch
        %143 = sbr.rel (%p141) target = $region16
      $region15: #{gemma_attention.5} parent=5 // pred_region
        // Predicated region
        $region17: #{gemma_attention.5} parent=15 // pred_check
          %p144 = pneg %p61
        $region18: #{gemma_attention.5} parent=15 // pred_check_branch
          %146 = sbr.rel (%p144) target = $region20
        $region19: #{gemma_attention.5} parent=15 // pred_region
          %p147 = scmp.lt.s32.totalorder %s21, 3
          %s148 = scalar_select %p147, %s21, 3
          %p149 = scmp.lt.s32.totalorder %s18, 1
          %s150 = scalar_select %p149, %s18, 1
          %p151 = scmp.lt.s32.totalorder %s19, 0
          %s152 = scalar_select %p151, %s19, 0
          %s153 = smul.addr %s152, 2
          %s154 = smul.addr %s150, 2
          %s155 = sadd.s32 %s153, %s154
          %s156 = smul.addr %s148, 4
          %s157 = sadd.s32 %s155, %s156
          %s158 = smul.addr %s157, 8
          %s159 = scalar_lea.vmem %s0, %s158
        $region20: #{gemma_attention.5} parent=15 // pred_fallthru
          _
        // Predicated region
        $region21: #{gemma_attention.5} parent=15 // pred_check
          %p160 = pneg %p89
        $region22: #{gemma_attention.5} parent=15 // pred_check_branch
          %162 = sbr.rel (%p160) target = $region24
        $region23: #{gemma_attention.5} parent=15 // pred_region
          %s163 = sand.u32 %s79, 1
          %s164 = sand.u32 %s79, 1
          %s165 = smul.addr %s164, 1024
          %s166 = scalar_lea.vmem [#allocation3], %s165
          %s167 = smul.u32 4, %s20
          %s168 = smul.addr %s21, 256
          %s169 = sadd.s32 %s167, %s168
          %s170 = smul.addr %s169, 8
          %s171 = scalar_lea.vmem %s1, %s170
          // Predicated region
          $region25: #{gemma_attention.5} parent=23 // pred_check
            _
          $region26: #{gemma_attention.5} parent=23 // pred_check_branch
            %173 = sbr.rel (0) target = $region28
          $region27: #{gemma_attention.5} parent=23 // pred_region
            // Predicated region
            $region29: #{gemma_attention.5} parent=27 // pred_check
              _
            $region30: #{gemma_attention.5} parent=27 // pred_check_branch
              %175 = sbr.rel (0) target = $region32
            $region31: #{gemma_attention.5} parent=27 // pred_region
              loop: start=0, step=1, limit=1
              $region33: #{gemma_attention.5} parent=31 // loop_pre_header
                _
              $region34: #{gemma_attention.5} parent=31 // loop_header
                %s177 = sphi 0, %s181
                %p178 = scmp.ge.s32.totalorder %s177, 1
                %s182 = sphi %s171, %s171
                %s183 = sphi %s166, %s166
              $region35: #{gemma_attention.5} parent=31 // loop_header_branch
                %180 = sbr.rel (%p178) target = $region39
              $region36: #{gemma_attention.5} parent=31 // loop_body
                %v184 = vld [vmem:[%s182] sm:$0xff]
                %185 = vst [vmem:[%s183] sm:$0xff] %v184
                %v186 = vld [vmem:[%s182 + $0x8] sm:$0xff]
                %187 = vst [vmem:[%s183 + $0x8] sm:$0xff] %v186
                %v188 = vld [vmem:[%s182 + $0x10] sm:$0xff]
                %189 = vst [vmem:[%s183 + $0x10] sm:$0xff] %v188
                %v190 = vld [vmem:[%s182 + $0x18] sm:$0xff]
                %191 = vst [vmem:[%s183 + $0x18] sm:$0xff] %v190
                %v192 = vld [vmem:[%s182 + $0x40] sm:$0xff]
                %193 = vst [vmem:[%s183 + $0x20] sm:$0xff] %v192
                %v194 = vld [vmem:[%s182 + $0x48] sm:$0xff]
                %195 = vst [vmem:[%s183 + $0x28] sm:$0xff] %v194
                %v196 = vld [vmem:[%s182 + $0x50] sm:$0xff]
                %197 = vst [vmem:[%s183 + $0x30] sm:$0xff] %v196
                %v198 = vld [vmem:[%s182 + $0x58] sm:$0xff]
                %199 = vst [vmem:[%s183 + $0x38] sm:$0xff] %v198
                %v200 = vld [vmem:[%s182 + $0x80] sm:$0xff]
                %201 = vst [vmem:[%s183 + $0x40] sm:$0xff] %v200
                %v202 = vld [vmem:[%s182 + $0x88] sm:$0xff]
                %203 = vst [vmem:[%s183 + $0x48] sm:$0xff] %v202
                %v204 = vld [vmem:[%s182 + $0x90] sm:$0xff]
                %205 = vst [vmem:[%s183 + $0x50] sm:$0xff] %v204
                %v206 = vld [vmem:[%s182 + $0x98] sm:$0xff]
                %207 = vst [vmem:[%s183 + $0x58] sm:$0xff] %v206
                %v208 = vld [vmem:[%s182 + $0xc0] sm:$0xff]
                %209 = vst [vmem:[%s183 + $0x60] sm:$0xff] %v208
                %v210 = vld [vmem:[%s182 + $0xc8] sm:$0xff]
                %211 = vst [vmem:[%s183 + $0x68] sm:$0xff] %v210
                %v212 = vld [vmem:[%s182 + $0xd0] sm:$0xff]
                %213 = vst [vmem:[%s183 + $0x70] sm:$0xff] %v212
                %v214 = vld [vmem:[%s182 + $0xd8] sm:$0xff]
                %215 = vst [vmem:[%s183 + $0x78] sm:$0xff] %v214
                %v216 = vld [vmem:[%s182 + $0x100] sm:$0xff]
                %217 = vst [vmem:[%s183 + $0x80] sm:$0xff] %v216
                %v218 = vld [vmem:[%s182 + $0x108] sm:$0xff]
                %219 = vst [vmem:[%s183 + $0x88] sm:$0xff] %v218
                %v220 = vld [vmem:[%s182 + $0x110] sm:$0xff]
                %221 = vst [vmem:[%s183 + $0x90] sm:$0xff] %v220
                %v222 = vld [vmem:[%s182 + $0x118] sm:$0xff]
                %223 = vst [vmem:[%s183 + $0x98] sm:$0xff] %v222
                %v224 = vld [vmem:[%s182 + $0x140] sm:$0xff]
                %225 = vst [vmem:[%s183 + $0xa0] sm:$0xff] %v224
                %v226 = vld [vmem:[%s182 + $0x148] sm:$0xff]
                %227 = vst [vmem:[%s183 + $0xa8] sm:$0xff] %v226
                %v228 = vld [vmem:[%s182 + $0x150] sm:$0xff]
                %229 = vst [vmem:[%s183 + $0xb0] sm:$0xff] %v228
                %v230 = vld [vmem:[%s182 + $0x158] sm:$0xff]
                %231 = vst [vmem:[%s183 + $0xb8] sm:$0xff] %v230
                %v232 = vld [vmem:[%s182 + $0x180] sm:$0xff]
                %233 = vst [vmem:[%s183 + $0xc0] sm:$0xff] %v232
                %v234 = vld [vmem:[%s182 + $0x188] sm:$0xff]
                %235 = vst [vmem:[%s183 + $0xc8] sm:$0xff] %v234
                %v236 = vld [vmem:[%s182 + $0x190] sm:$0xff]
                %237 = vst [vmem:[%s183 + $0xd0] sm:$0xff] %v236
                %v238 = vld [vmem:[%s182 + $0x198] sm:$0xff]
                %239 = vst [vmem:[%s183 + $0xd8] sm:$0xff] %v238
                %v240 = vld [vmem:[%s182 + $0x1c0] sm:$0xff]
                %241 = vst [vmem:[%s183 + $0xe0] sm:$0xff] %v240
                %v242 = vld [vmem:[%s182 + $0x1c8] sm:$0xff]
                %243 = vst [vmem:[%s183 + $0xe8] sm:$0xff] %v242
                %v244 = vld [vmem:[%s182 + $0x1d0] sm:$0xff]
                %245 = vst [vmem:[%s183 + $0xf0] sm:$0xff] %v244
                %v246 = vld [vmem:[%s182 + $0x1d8] sm:$0xff]
                %247 = vst [vmem:[%s183 + $0xf8] sm:$0xff] %v246
                %v248 = vld [vmem:[%s182 + $0x200] sm:$0xff]
                %249 = vst [vmem:[%s183 + $0x100] sm:$0xff] %v248
                %v250 = vld [vmem:[%s182 + $0x208] sm:$0xff]
                %251 = vst [vmem:[%s183 + $0x108] sm:$0xff] %v250
                %v252 = vld [vmem:[%s182 + $0x210] sm:$0xff]
                %253 = vst [vmem:[%s183 + $0x110] sm:$0xff] %v252
                %v254 = vld [vmem:[%s182 + $0x218] sm:$0xff]
                %255 = vst [vmem:[%s183 + $0x118] sm:$0xff] %v254
                %v256 = vld [vmem:[%s182 + $0x240] sm:$0xff]
                %257 = vst [vmem:[%s183 + $0x120] sm:$0xff] %v256
                %v258 = vld [vmem:[%s182 + $0x248] sm:$0xff]
                %259 = vst [vmem:[%s183 + $0x128] sm:$0xff] %v258
                %v260 = vld [vmem:[%s182 + $0x250] sm:$0xff]
                %261 = vst [vmem:[%s183 + $0x130] sm:$0xff] %v260
                %v262 = vld [vmem:[%s182 + $0x258] sm:$0xff]
                %263 = vst [vmem:[%s183 + $0x138] sm:$0xff] %v262
                %v264 = vld [vmem:[%s182 + $0x280] sm:$0xff]
                %265 = vst [vmem:[%s183 + $0x140] sm:$0xff] %v264
                %v266 = vld [vmem:[%s182 + $0x288] sm:$0xff]
                %267 = vst [vmem:[%s183 + $0x148] sm:$0xff] %v266
                %v268 = vld [vmem:[%s182 + $0x290] sm:$0xff]
                %269 = vst [vmem:[%s183 + $0x150] sm:$0xff] %v268
                %v270 = vld [vmem:[%s182 + $0x298] sm:$0xff]
                %271 = vst [vmem:[%s183 + $0x158] sm:$0xff] %v270
                %v272 = vld [vmem:[%s182 + $0x2c0] sm:$0xff]
                %273 = vst [vmem:[%s183 + $0x160] sm:$0xff] %v272
                %v274 = vld [vmem:[%s182 + $0x2c8] sm:$0xff]
                %275 = vst [vmem:[%s183 + $0x168] sm:$0xff] %v274
                %v276 = vld [vmem:[%s182 + $0x2d0] sm:$0xff]
                %277 = vst [vmem:[%s183 + $0x170] sm:$0xff] %v276
                %v278 = vld [vmem:[%s182 + $0x2d8] sm:$0xff]
                %279 = vst [vmem:[%s183 + $0x178] sm:$0xff] %v278
                %v280 = vld [vmem:[%s182 + $0x300] sm:$0xff]
                %281 = vst [vmem:[%s183 + $0x180] sm:$0xff] %v280
                %v282 = vld [vmem:[%s182 + $0x308] sm:$0xff]
                %283 = vst [vmem:[%s183 + $0x188] sm:$0xff] %v282
                %v284 = vld [vmem:[%s182 + $0x310] sm:$0xff]
                %285 = vst [vmem:[%s183 + $0x190] sm:$0xff] %v284
                %v286 = vld [vmem:[%s182 + $0x318] sm:$0xff]
                %287 = vst [vmem:[%s183 + $0x198] sm:$0xff] %v286
                %v288 = vld [vmem:[%s182 + $0x340] sm:$0xff]
                %289 = vst [vmem:[%s183 + $0x1a0] sm:$0xff] %v288
                %v290 = vld [vmem:[%s182 + $0x348] sm:$0xff]
                %291 = vst [vmem:[%s183 + $0x1a8] sm:$0xff] %v290
                %v292 = vld [vmem:[%s182 + $0x350] sm:$0xff]
                %293 = vst [vmem:[%s183 + $0x1b0] sm:$0xff] %v292
                %v294 = vld [vmem:[%s182 + $0x358] sm:$0xff]
                %295 = vst [vmem:[%s183 + $0x1b8] sm:$0xff] %v294
                %v296 = vld [vmem:[%s182 + $0x380] sm:$0xff]
                %297 = vst [vmem:[%s183 + $0x1c0] sm:$0xff] %v296
                %v298 = vld [vmem:[%s182 + $0x388] sm:$0xff]
                %299 = vst [vmem:[%s183 + $0x1c8] sm:$0xff] %v298
                %v300 = vld [vmem:[%s182 + $0x390] sm:$0xff]
                %301 = vst [vmem:[%s183 + $0x1d0] sm:$0xff] %v300
                %v302 = vld [vmem:[%s182 + $0x398] sm:$0xff]
                %303 = vst [vmem:[%s183 + $0x1d8] sm:$0xff] %v302
                %v304 = vld [vmem:[%s182 + $0x3c0] sm:$0xff]
                %305 = vst [vmem:[%s183 + $0x1e0] sm:$0xff] %v304
                %v306 = vld [vmem:[%s182 + $0x3c8] sm:$0xff]
                %307 = vst [vmem:[%s183 + $0x1e8] sm:$0xff] %v306
                %v308 = vld [vmem:[%s182 + $0x3d0] sm:$0xff]
                %309 = vst [vmem:[%s183 + $0x1f0] sm:$0xff] %v308
                %v310 = vld [vmem:[%s182 + $0x3d8] sm:$0xff]
                %311 = vst [vmem:[%s183 + $0x1f8] sm:$0xff] %v310
                %v312 = vld [vmem:[%s182 + $0x400] sm:$0xff]
                %313 = vst [vmem:[%s183 + $0x200] sm:$0xff] %v312
                %v314 = vld [vmem:[%s182 + $0x408] sm:$0xff]
                %315 = vst [vmem:[%s183 + $0x208] sm:$0xff] %v314
                %v316 = vld [vmem:[%s182 + $0x410] sm:$0xff]
                %317 = vst [vmem:[%s183 + $0x210] sm:$0xff] %v316
                %v318 = vld [vmem:[%s182 + $0x418] sm:$0xff]
                %319 = vst [vmem:[%s183 + $0x218] sm:$0xff] %v318
                %v320 = vld [vmem:[%s182 + $0x440] sm:$0xff]
                %321 = vst [vmem:[%s183 + $0x220] sm:$0xff] %v320
                %v322 = vld [vmem:[%s182 + $0x448] sm:$0xff]
                %323 = vst [vmem:[%s183 + $0x228] sm:$0xff] %v322
                %v324 = vld [vmem:[%s182 + $0x450] sm:$0xff]
                %325 = vst [vmem:[%s183 + $0x230] sm:$0xff] %v324
                %v326 = vld [vmem:[%s182 + $0x458] sm:$0xff]
                %327 = vst [vmem:[%s183 + $0x238] sm:$0xff] %v326
                %v328 = vld [vmem:[%s182 + $0x480] sm:$0xff]
                %329 = vst [vmem:[%s183 + $0x240] sm:$0xff] %v328
                %v330 = vld [vmem:[%s182 + $0x488] sm:$0xff]
                %331 = vst [vmem:[%s183 + $0x248] sm:$0xff] %v330
                %v332 = vld [vmem:[%s182 + $0x490] sm:$0xff]
                %333 = vst [vmem:[%s183 + $0x250] sm:$0xff] %v332
                %v334 = vld [vmem:[%s182 + $0x498] sm:$0xff]
                %335 = vst [vmem:[%s183 + $0x258] sm:$0xff] %v334
                %v336 = vld [vmem:[%s182 + $0x4c0] sm:$0xff]
                %337 = vst [vmem:[%s183 + $0x260] sm:$0xff] %v336
                %v338 = vld [vmem:[%s182 + $0x4c8] sm:$0xff]
                %339 = vst [vmem:[%s183 + $0x268] sm:$0xff] %v338
                %v340 = vld [vmem:[%s182 + $0x4d0] sm:$0xff]
                %341 = vst [vmem:[%s183 + $0x270] sm:$0xff] %v340
                %v342 = vld [vmem:[%s182 + $0x4d8] sm:$0xff]
                %343 = vst [vmem:[%s183 + $0x278] sm:$0xff] %v342
                %v344 = vld [vmem:[%s182 + $0x500] sm:$0xff]
                %345 = vst [vmem:[%s183 + $0x280] sm:$0xff] %v344
                %v346 = vld [vmem:[%s182 + $0x508] sm:$0xff]
                %347 = vst [vmem:[%s183 + $0x288] sm:$0xff] %v346
                %v348 = vld [vmem:[%s182 + $0x510] sm:$0xff]
                %349 = vst [vmem:[%s183 + $0x290] sm:$0xff] %v348
                %v350 = vld [vmem:[%s182 + $0x518] sm:$0xff]
                %351 = vst [vmem:[%s183 + $0x298] sm:$0xff] %v350
                %v352 = vld [vmem:[%s182 + $0x540] sm:$0xff]
                %353 = vst [vmem:[%s183 + $0x2a0] sm:$0xff] %v352
                %v354 = vld [vmem:[%s182 + $0x548] sm:$0xff]
                %355 = vst [vmem:[%s183 + $0x2a8] sm:$0xff] %v354
                %v356 = vld [vmem:[%s182 + $0x550] sm:$0xff]
                %357 = vst [vmem:[%s183 + $0x2b0] sm:$0xff] %v356
                %v358 = vld [vmem:[%s182 + $0x558] sm:$0xff]
                %359 = vst [vmem:[%s183 + $0x2b8] sm:$0xff] %v358
                %v360 = vld [vmem:[%s182 + $0x580] sm:$0xff]
                %361 = vst [vmem:[%s183 + $0x2c0] sm:$0xff] %v360
                %v362 = vld [vmem:[%s182 + $0x588] sm:$0xff]
                %363 = vst [vmem:[%s183 + $0x2c8] sm:$0xff] %v362
                %v364 = vld [vmem:[%s182 + $0x590] sm:$0xff]
                %365 = vst [vmem:[%s183 + $0x2d0] sm:$0xff] %v364
                %v366 = vld [vmem:[%s182 + $0x598] sm:$0xff]
                %367 = vst [vmem:[%s183 + $0x2d8] sm:$0xff] %v366
                %v368 = vld [vmem:[%s182 + $0x5c0] sm:$0xff]
                %369 = vst [vmem:[%s183 + $0x2e0] sm:$0xff] %v368
                %v370 = vld [vmem:[%s182 + $0x5c8] sm:$0xff]
                %371 = vst [vmem:[%s183 + $0x2e8] sm:$0xff] %v370
                %v372 = vld [vmem:[%s182 + $0x5d0] sm:$0xff]
                %373 = vst [vmem:[%s183 + $0x2f0] sm:$0xff] %v372
                %v374 = vld [vmem:[%s182 + $0x5d8] sm:$0xff]
                %375 = vst [vmem:[%s183 + $0x2f8] sm:$0xff] %v374
                %v376 = vld [vmem:[%s182 + $0x600] sm:$0xff]
                %377 = vst [vmem:[%s183 + $0x300] sm:$0xff] %v376
                %v378 = vld [vmem:[%s182 + $0x608] sm:$0xff]
                %379 = vst [vmem:[%s183 + $0x308] sm:$0xff] %v378
                %v380 = vld [vmem:[%s182 + $0x610] sm:$0xff]
                %381 = vst [vmem:[%s183 + $0x310] sm:$0xff] %v380
                %v382 = vld [vmem:[%s182 + $0x618] sm:$0xff]
                %383 = vst [vmem:[%s183 + $0x318] sm:$0xff] %v382
                %v384 = vld [vmem:[%s182 + $0x640] sm:$0xff]
                %385 = vst [vmem:[%s183 + $0x320] sm:$0xff] %v384
                %v386 = vld [vmem:[%s182 + $0x648] sm:$0xff]
                %387 = vst [vmem:[%s183 + $0x328] sm:$0xff] %v386
                %v388 = vld [vmem:[%s182 + $0x650] sm:$0xff]
                %389 = vst [vmem:[%s183 + $0x330] sm:$0xff] %v388
                %v390 = vld [vmem:[%s182 + $0x658] sm:$0xff]
                %391 = vst [vmem:[%s183 + $0x338] sm:$0xff] %v390
                %v392 = vld [vmem:[%s182 + $0x680] sm:$0xff]
                %393 = vst [vmem:[%s183 + $0x340] sm:$0xff] %v392
                %v394 = vld [vmem:[%s182 + $0x688] sm:$0xff]
                %395 = vst [vmem:[%s183 + $0x348] sm:$0xff] %v394
                %v396 = vld [vmem:[%s182 + $0x690] sm:$0xff]
                %397 = vst [vmem:[%s183 + $0x350] sm:$0xff] %v396
                %v398 = vld [vmem:[%s182 + $0x698] sm:$0xff]
                %399 = vst [vmem:[%s183 + $0x358] sm:$0xff] %v398
                %v400 = vld [vmem:[%s182 + $0x6c0] sm:$0xff]
                %401 = vst [vmem:[%s183 + $0x360] sm:$0xff] %v400
                %v402 = vld [vmem:[%s182 + $0x6c8] sm:$0xff]
                %403 = vst [vmem:[%s183 + $0x368] sm:$0xff] %v402
                %v404 = vld [vmem:[%s182 + $0x6d0] sm:$0xff]
                %405 = vst [vmem:[%s183 + $0x370] sm:$0xff] %v404
                %v406 = vld [vmem:[%s182 + $0x6d8] sm:$0xff]
                %407 = vst [vmem:[%s183 + $0x378] sm:$0xff] %v406
                %v408 = vld [vmem:[%s182 + $0x700] sm:$0xff]
                %409 = vst [vmem:[%s183 + $0x380] sm:$0xff] %v408
                %v410 = vld [vmem:[%s182 + $0x708] sm:$0xff]
                %411 = vst [vmem:[%s183 + $0x388] sm:$0xff] %v410
                %v412 = vld [vmem:[%s182 + $0x710] sm:$0xff]
                %413 = vst [vmem:[%s183 + $0x390] sm:$0xff] %v412
                %v414 = vld [vmem:[%s182 + $0x718] sm:$0xff]
                %415 = vst [vmem:[%s183 + $0x398] sm:$0xff] %v414
                %v416 = vld [vmem:[%s182 + $0x740] sm:$0xff]
                %417 = vst [vmem:[%s183 + $0x3a0] sm:$0xff] %v416
                %v418 = vld [vmem:[%s182 + $0x748] sm:$0xff]
                %419 = vst [vmem:[%s183 + $0x3a8] sm:$0xff] %v418
                %v420 = vld [vmem:[%s182 + $0x750] sm:$0xff]
                %421 = vst [vmem:[%s183 + $0x3b0] sm:$0xff] %v420
                %v422 = vld [vmem:[%s182 + $0x758] sm:$0xff]
                %423 = vst [vmem:[%s183 + $0x3b8] sm:$0xff] %v422
                %v424 = vld [vmem:[%s182 + $0x780] sm:$0xff]
                %425 = vst [vmem:[%s183 + $0x3c0] sm:$0xff] %v424
                %v426 = vld [vmem:[%s182 + $0x788] sm:$0xff]
                %427 = vst [vmem:[%s183 + $0x3c8] sm:$0xff] %v426
                %v428 = vld [vmem:[%s182 + $0x790] sm:$0xff]
                %429 = vst [vmem:[%s183 + $0x3d0] sm:$0xff] %v428
                %v430 = vld [vmem:[%s182 + $0x798] sm:$0xff]
                %431 = vst [vmem:[%s183 + $0x3d8] sm:$0xff] %v430
                %v432 = vld [vmem:[%s182 + $0x7c0] sm:$0xff]
                %433 = vst [vmem:[%s183 + $0x3e0] sm:$0xff] %v432
                %v434 = vld [vmem:[%s182 + $0x7c8] sm:$0xff]
                %435 = vst [vmem:[%s183 + $0x3e8] sm:$0xff] %v434
                %v436 = vld [vmem:[%s182 + $0x7d0] sm:$0xff]
                %437 = vst [vmem:[%s183 + $0x3f0] sm:$0xff] %v436
                %v438 = vld [vmem:[%s182 + $0x7d8] sm:$0xff]
                %439 = vst [vmem:[%s183 + $0x3f8] sm:$0xff] %v438
              $region37: #{gemma_attention.5} parent=31 // loop_footer
                %s181 = sadd.s32 1, %s177
              $region38: #{gemma_attention.5} parent=31 // loop_footer_branch
                %176 = sbr.rel target = $region34
              $region39: #{gemma_attention.5} parent=31 // loop_exit
                _
            $region32: #{gemma_attention.5} parent=27 // pred_fallthru
              _
            // Predicated region
            $region40: #{gemma_attention.5} parent=27 // pred_check
              _
            $region41: #{gemma_attention.5} parent=27 // pred_check_branch
              %441 = sbr.rel target = $region43
            $region42: #{gemma_attention.5} parent=27 // pred_region
              _
            $region43: #{gemma_attention.5} parent=27 // pred_fallthru
              _
          $region28: #{gemma_attention.5} parent=23 // pred_fallthru
            _
          %442 = vnop
        $region24: #{gemma_attention.5} parent=15 // pred_fallthru
          _
      $region16: #{gemma_attention.5} parent=5 // pred_fallthru
        _
      %p443 = scmp.le.s32.totalorder 1, %s11
      %p444 = scmp.lt.s32.totalorder %s11, 17
      %p445 = pnand %p443, %p444
      %p446 = pneg %p445
      // Predicated region
      $region44: #{gemma_attention.5} parent=5 // pred_check
        _
      $region45: #{gemma_attention.5} parent=5 // pred_check_branch
        %448 = sbr.rel (%p445) target = $region47
      $region46: #{gemma_attention.5} parent=5 // pred_region
        %s449 = ssub.s32 %s11, 1
        %s450 = sand.u32 %s82, 1
        %s451 = sand.u32 %s82, 1
        %s452 = smul.addr %s451, 1024
        %s453 = scalar_lea.vmem [#allocation3], %s452
        // Predicated region
        $region48: #{gemma_attention.5} parent=46 // pred_check
          %p454 = pneg %p95
        $region49: #{gemma_attention.5} parent=46 // pred_check_branch
          %456 = sbr.rel (%p454) target = $region51
        $region50: #{gemma_attention.5} parent=46 // pred_region
          _
        $region51: #{gemma_attention.5} parent=46 // pred_fallthru
          _
        %p457 = scmp.lt.s32.totalorder %s25, 3
        %s458 = scalar_select %p457, %s25, 3
        %p459 = scmp.lt.s32.totalorder %s22, 1
        %s460 = scalar_select %p459, %s22, 1
        %p461 = scmp.lt.s32.totalorder %s23, 0
        %s462 = scalar_select %p461, %s23, 0
        %s463 = smul.addr %s462, 2
        %s464 = smul.addr %s460, 2
        %s465 = sadd.s32 %s463, %s464
        %s466 = smul.addr %s458, 4
        %s467 = sadd.s32 %s465, %s466
        %s468 = smul.addr %s467, 8
        %s469 = scalar_lea.vmem %s0, %s468
        %p470 = pneg %p67
        %p471 = pneg %p64
        %s472 = sand.u32 %s82, 1
        %s473 = sand.u32 %s82, 1
        %s474 = smul.addr %s473, 1024
        %s475 = scalar_lea.vmem [#allocation3], %s474
        %p476 = pneg %p95
        %p477 = pneg %p92
        %p478 = pneg %p125
        %p479 = pneg %p122
        %s480 = sand.u32 %s112, 1
        %s481 = scalar_lea.sflag [#allocation5], %s480
        %s482 = sand.u32 %s112, 1
        %s483 = smul.addr %s482, 32
        %s484 = scalar_lea.vmem [#allocation4], %s483
        %p485 = scmp.lt.s32.totalorder %s25, 3
        %s486 = scalar_select %p485, %s25, 3
        %p487 = scmp.lt.s32.totalorder %s22, 1
        %s488 = scalar_select %p487, %s22, 1
        %p489 = scmp.lt.s32.totalorder %s23, 0
        %s490 = scalar_select %p489, %s23, 0
        %s491 = smul.addr %s490, 2
        %s492 = smul.addr %s488, 2
        %s493 = sadd.s32 %s491, %s492
        %s494 = smul.addr %s486, 4
        %s495 = sadd.s32 %s493, %s494
        %s496 = smul.addr %s495, 8
        %s497 = scalar_lea.vmem %s0, %s496
        %s498 = smul.u32 4, %s24
        %s499 = smul.u32 4, %s24
        %p500 = scmp.eq.s32.totalorder %s25, 0
        // Predicated region
        $region52: #{gemma_attention.5} parent=46 // pred_check
          %p501 = pneg %p500
        $region53: #{gemma_attention.5} parent=46 // pred_check_branch
          %503 = sbr.rel (%p501) target = $region55
        $region54: #{gemma_attention.5} parent=46 // pred_region
          %504 = vst [vmem:[#allocation2] sm:$0xff] 0.0
          %505 = vst [vmem:[#allocation2 + $0x8] sm:$0xff] 0.0
          %506 = vst [vmem:[#allocation2 + $0x10] sm:$0xff] 0.0
          %507 = vst [vmem:[#allocation2 + $0x18] sm:$0xff] 0.0
        $region55: #{gemma_attention.5} parent=46 // pred_fallthru
          _
        %v508 = vld [vmem:[#allocation2] sm:$0xff]
        %v509 = vld [vmem:[#allocation2 + $0x8] sm:$0xff]
        %v510 = vld [vmem:[#allocation2 + $0x10] sm:$0xff]
        %v511 = vld [vmem:[#allocation2 + $0x18] sm:$0xff]
        %v512 = vld [vmem:[%s497] sm:$0xff]
        %v513 = vld [vmem:[%s497 + $0x8] sm:$0xff]
        %v514 = vld [vmem:[%s453] sm:$0xff]
        %v515 = vld [vmem:[%s453 + $0x8] sm:$0xff]
        %v516 = vld [vmem:[%s453 + $0x10] sm:$0xff]
        %v517 = vld [vmem:[%s453 + $0x18] sm:$0xff]
        %v518 = vld [vmem:[%s453 + $0x20] sm:$0xff]
        %v519 = vld [vmem:[%s453 + $0x28] sm:$0xff]
        %v520 = vld [vmem:[%s453 + $0x30] sm:$0xff]
        %v521 = vld [vmem:[%s453 + $0x38] sm:$0xff]
        %v522 = vld [vmem:[%s453 + $0x40] sm:$0xff]
        %v523 = vld [vmem:[%s453 + $0x48] sm:$0xff]
        %v524 = vld [vmem:[%s453 + $0x50] sm:$0xff]
        %v525 = vld [vmem:[%s453 + $0x58] sm:$0xff]
        %v526 = vld [vmem:[%s453 + $0x60] sm:$0xff]
        %v527 = vld [vmem:[%s453 + $0x68] sm:$0xff]
        %v528 = vld [vmem:[%s453 + $0x70] sm:$0xff]
        %v529 = vld [vmem:[%s453 + $0x78] sm:$0xff]
        %v530 = vld [vmem:[%s453 + $0x80] sm:$0xff]
        %v531 = vld [vmem:[%s453 + $0x88] sm:$0xff]
        %v532 = vld [vmem:[%s453 + $0x90] sm:$0xff]
        %v533 = vld [vmem:[%s453 + $0x98] sm:$0xff]
        %v534 = vld [vmem:[%s453 + $0xa0] sm:$0xff]
        %v535 = vld [vmem:[%s453 + $0xa8] sm:$0xff]
        %v536 = vld [vmem:[%s453 + $0xb0] sm:$0xff]
        %v537 = vld [vmem:[%s453 + $0xb8] sm:$0xff]
        %v538 = vld [vmem:[%s453 + $0xc0] sm:$0xff]
        %v539 = vld [vmem:[%s453 + $0xc8] sm:$0xff]
        %v540 = vld [vmem:[%s453 + $0xd0] sm:$0xff]
        %v541 = vld [vmem:[%s453 + $0xd8] sm:$0xff]
        %v542 = vld [vmem:[%s453 + $0xe0] sm:$0xff]
        %v543 = vld [vmem:[%s453 + $0xe8] sm:$0xff]
        %v544 = vld [vmem:[%s453 + $0xf0] sm:$0xff]
        %v545 = vld [vmem:[%s453 + $0xf8] sm:$0xff]
        %v546 = vld [vmem:[%s453 + $0x100] sm:$0xff]
        %v547 = vld [vmem:[%s453 + $0x108] sm:$0xff]
        %v548 = vld [vmem:[%s453 + $0x110] sm:$0xff]
        %v549 = vld [vmem:[%s453 + $0x118] sm:$0xff]
        %v550 = vld [vmem:[%s453 + $0x120] sm:$0xff]
        %v551 = vld [vmem:[%s453 + $0x128] sm:$0xff]
        %v552 = vld [vmem:[%s453 + $0x130] sm:$0xff]
        %v553 = vld [vmem:[%s453 + $0x138] sm:$0xff]
        %v554 = vld [vmem:[%s453 + $0x140] sm:$0xff]
        %v555 = vld [vmem:[%s453 + $0x148] sm:$0xff]
        %v556 = vld [vmem:[%s453 + $0x150] sm:$0xff]
        %v557 = vld [vmem:[%s453 + $0x158] sm:$0xff]
        %v558 = vld [vmem:[%s453 + $0x160] sm:$0xff]
        %v559 = vld [vmem:[%s453 + $0x168] sm:$0xff]
        %v560 = vld [vmem:[%s453 + $0x170] sm:$0xff]
        %v561 = vld [vmem:[%s453 + $0x178] sm:$0xff]
        %v562 = vld [vmem:[%s453 + $0x180] sm:$0xff]
        %v563 = vld [vmem:[%s453 + $0x188] sm:$0xff]
        %v564 = vld [vmem:[%s453 + $0x190] sm:$0xff]
        %v565 = vld [vmem:[%s453 + $0x198] sm:$0xff]
        %v566 = vld [vmem:[%s453 + $0x1a0] sm:$0xff]
        %v567 = vld [vmem:[%s453 + $0x1a8] sm:$0xff]
        %v568 = vld [vmem:[%s453 + $0x1b0] sm:$0xff]
        %v569 = vld [vmem:[%s453 + $0x1b8] sm:$0xff]
        %v570 = vld [vmem:[%s453 + $0x1c0] sm:$0xff]
        %v571 = vld [vmem:[%s453 + $0x1c8] sm:$0xff]
        %v572 = vld [vmem:[%s453 + $0x1d0] sm:$0xff]
        %v573 = vld [vmem:[%s453 + $0x1d8] sm:$0xff]
        %v574 = vld [vmem:[%s453 + $0x1e0] sm:$0xff]
        %v575 = vld [vmem:[%s453 + $0x1e8] sm:$0xff]
        %v576 = vld [vmem:[%s453 + $0x1f0] sm:$0xff]
        %v577 = vld [vmem:[%s453 + $0x1f8] sm:$0xff]
        %v578 = vld [vmem:[%s453 + $0x200] sm:$0xff]
        %v579 = vld [vmem:[%s453 + $0x208] sm:$0xff]
        %v580 = vld [vmem:[%s453 + $0x210] sm:$0xff]
        %v581 = vld [vmem:[%s453 + $0x218] sm:$0xff]
        %v582 = vld [vmem:[%s453 + $0x220] sm:$0xff]
        %v583 = vld [vmem:[%s453 + $0x228] sm:$0xff]
        %v584 = vld [vmem:[%s453 + $0x230] sm:$0xff]
        %v585 = vld [vmem:[%s453 + $0x238] sm:$0xff]
        %v586 = vld [vmem:[%s453 + $0x240] sm:$0xff]
        %v587 = vld [vmem:[%s453 + $0x248] sm:$0xff]
        %v588 = vld [vmem:[%s453 + $0x250] sm:$0xff]
        %v589 = vld [vmem:[%s453 + $0x258] sm:$0xff]
        %v590 = vld [vmem:[%s453 + $0x260] sm:$0xff]
        %v591 = vld [vmem:[%s453 + $0x268] sm:$0xff]
        %v592 = vld [vmem:[%s453 + $0x270] sm:$0xff]
        %v593 = vld [vmem:[%s453 + $0x278] sm:$0xff]
        %v594 = vld [vmem:[%s453 + $0x280] sm:$0xff]
        %v595 = vld [vmem:[%s453 + $0x288] sm:$0xff]
        %v596 = vld [vmem:[%s453 + $0x290] sm:$0xff]
        %v597 = vld [vmem:[%s453 + $0x298] sm:$0xff]
        %v598 = vld [vmem:[%s453 + $0x2a0] sm:$0xff]
        %v599 = vld [vmem:[%s453 + $0x2a8] sm:$0xff]
        %v600 = vld [vmem:[%s453 + $0x2b0] sm:$0xff]
        %v601 = vld [vmem:[%s453 + $0x2b8] sm:$0xff]
        %v602 = vld [vmem:[%s453 + $0x2c0] sm:$0xff]
        %v603 = vld [vmem:[%s453 + $0x2c8] sm:$0xff]
        %v604 = vld [vmem:[%s453 + $0x2d0] sm:$0xff]
        %v605 = vld [vmem:[%s453 + $0x2d8] sm:$0xff]
        %v606 = vld [vmem:[%s453 + $0x2e0] sm:$0xff]
        %v607 = vld [vmem:[%s453 + $0x2e8] sm:$0xff]
        %v608 = vld [vmem:[%s453 + $0x2f0] sm:$0xff]
        %v609 = vld [vmem:[%s453 + $0x2f8] sm:$0xff]
        %v610 = vld [vmem:[%s453 + $0x300] sm:$0xff]
        %v611 = vld [vmem:[%s453 + $0x308] sm:$0xff]
        %v612 = vld [vmem:[%s453 + $0x310] sm:$0xff]
        %v613 = vld [vmem:[%s453 + $0x318] sm:$0xff]
        %v614 = vld [vmem:[%s453 + $0x320] sm:$0xff]
        %v615 = vld [vmem:[%s453 + $0x328] sm:$0xff]
        %v616 = vld [vmem:[%s453 + $0x330] sm:$0xff]
        %v617 = vld [vmem:[%s453 + $0x338] sm:$0xff]
        %v618 = vld [vmem:[%s453 + $0x340] sm:$0xff]
        %v619 = vld [vmem:[%s453 + $0x348] sm:$0xff]
        %v620 = vld [vmem:[%s453 + $0x350] sm:$0xff]
        %v621 = vld [vmem:[%s453 + $0x358] sm:$0xff]
        %v622 = vld [vmem:[%s453 + $0x360] sm:$0xff]
        %v623 = vld [vmem:[%s453 + $0x368] sm:$0xff]
        %v624 = vld [vmem:[%s453 + $0x370] sm:$0xff]
        %v625 = vld [vmem:[%s453 + $0x378] sm:$0xff]
        %v626 = vld [vmem:[%s453 + $0x380] sm:$0xff]
        %v627 = vld [vmem:[%s453 + $0x388] sm:$0xff]
        %v628 = vld [vmem:[%s453 + $0x390] sm:$0xff]
        %v629 = vld [vmem:[%s453 + $0x398] sm:$0xff]
        %v630 = vld [vmem:[%s453 + $0x3a0] sm:$0xff]
        %v631 = vld [vmem:[%s453 + $0x3a8] sm:$0xff]
        %v632 = vld [vmem:[%s453 + $0x3b0] sm:$0xff]
        %v633 = vld [vmem:[%s453 + $0x3b8] sm:$0xff]
        %v634 = vld [vmem:[%s453 + $0x3c0] sm:$0xff]
        %v635 = vld [vmem:[%s453 + $0x3c8] sm:$0xff]
        %v636 = vld [vmem:[%s453 + $0x3d0] sm:$0xff]
        %v637 = vld [vmem:[%s453 + $0x3d8] sm:$0xff]
        %v638 = vld [vmem:[%s453 + $0x3e0] sm:$0xff]
        %v639 = vld [vmem:[%s453 + $0x3e8] sm:$0xff]
        %v640 = vld [vmem:[%s453 + $0x3f0] sm:$0xff]
        %v641 = vld [vmem:[%s453 + $0x3f8] sm:$0xff]
        %642 = vmatprep.subr.mxu0 %v515
        %643 = vmatpush1.msra.mxu0 %v514
        %644 = vmatprep.subr.mxu0 %v519
        %645 = vmatpush1.msra.mxu0 %v518
        %646 = vmatprep.subr.mxu0 %v523
        %647 = vmatpush1.msra.mxu0 %v522
        %648 = vmatprep.subr.mxu0 %v527
        %649 = vmatpush1.msra.mxu0 %v526
        %650 = vmatprep.subr.mxu0 %v531
        %651 = vmatpush1.msra.mxu0 %v530
        %652 = vmatprep.subr.mxu0 %v535
        %653 = vmatpush1.msra.mxu0 %v534
        %654 = vmatprep.subr.mxu0 %v539
        %655 = vmatpush1.msra.mxu0 %v538
        %656 = vmatprep.subr.mxu0 %v543
        %657 = vmatpush1.msra.mxu0 %v542
        %658 = vmatprep.subr.mxu0 %v547
        %659 = vmatpush1.msra.mxu0 %v546
        %660 = vmatprep.subr.mxu0 %v551
        %661 = vmatpush1.msra.mxu0 %v550
        %662 = vmatprep.subr.mxu0 %v555
        %663 = vmatpush1.msra.mxu0 %v554
        %664 = vmatprep.subr.mxu0 %v559
        %665 = vmatpush1.msra.mxu0 %v558
        %666 = vmatprep.subr.mxu0 %v563
        %667 = vmatpush1.msra.mxu0 %v562
        %668 = vmatprep.subr.mxu0 %v567
        %669 = vmatpush1.msra.mxu0 %v566
        %670 = vmatprep.subr.mxu0 %v571
        %671 = vmatpush1.msra.mxu0 %v570
        %672 = vmatprep.subr.mxu0 %v575
        %673 = vmatpush1.msra.mxu0 %v574
        %674 = vmatprep.subr.mxu0 %v579
        %675 = vmatpush1.msra.mxu0 %v578
        %676 = vmatprep.subr.mxu0 %v583
        %677 = vmatpush1.msra.mxu0 %v582
        %678 = vmatprep.subr.mxu0 %v587
        %679 = vmatpush1.msra.mxu0 %v586
        %680 = vmatprep.subr.mxu0 %v591
        %681 = vmatpush1.msra.mxu0 %v590
        %682 = vmatprep.subr.mxu0 %v595
        %683 = vmatpush1.msra.mxu0 %v594
        %684 = vmatprep.subr.mxu0 %v599
        %685 = vmatpush1.msra.mxu0 %v598
        %686 = vmatprep.subr.mxu0 %v603
        %687 = vmatpush1.msra.mxu0 %v602
        %688 = vmatprep.subr.mxu0 %v607
        %689 = vmatpush1.msra.mxu0 %v606
        %690 = vmatprep.subr.mxu0 %v611
        %691 = vmatpush1.msra.mxu0 %v610
        %692 = vmatprep.subr.mxu0 %v615
        %693 = vmatpush1.msra.mxu0 %v614
        %694 = vmatprep.subr.mxu0 %v619
        %695 = vmatpush1.msra.mxu0 %v618
        %696 = vmatprep.subr.mxu0 %v623
        %697 = vmatpush1.msra.mxu0 %v622
        %698 = vmatprep.subr.mxu0 %v627
        %699 = vmatpush1.msra.mxu0 %v626
        %700 = vmatprep.subr.mxu0 %v631
        %701 = vmatpush1.msra.mxu0 %v630
        %702 = vmatprep.subr.mxu0 %v635
        %703 = vmatpush1.msra.mxu0 %v634
        %704 = vmatprep.subr.mxu0 %v639
        %705 = vmatpush1.msra.mxu0 %v638
        %706 = vmatprep.mubr.f32.mxu0 %v513
        %707 = vmatmul.mubr.f32.gmra.mrb[0].mxu0 %v512
        %v708 = vpop.f32.mrb[0].mxu0
        %v709 = vadd.f32 0.0, %v708
        %v710 = vpop.f32.mrb[0].mxu0
        %v711 = vadd.f32 0.0, %v710
        %712 = vdwg.mxu0
        %713 = vmatprep.subr.mxu0 %v517
        %714 = vmatpush1.msra.mxu0 %v516
        %715 = vmatprep.subr.mxu0 %v521
        %716 = vmatpush1.msra.mxu0 %v520
        %717 = vmatprep.subr.mxu0 %v525
        %718 = vmatpush1.msra.mxu0 %v524
        %719 = vmatprep.subr.mxu0 %v529
        %720 = vmatpush1.msra.mxu0 %v528
        %721 = vmatprep.subr.mxu0 %v533
        %722 = vmatpush1.msra.mxu0 %v532
        %723 = vmatprep.subr.mxu0 %v537
        %724 = vmatpush1.msra.mxu0 %v536
        %725 = vmatprep.subr.mxu0 %v541
        %726 = vmatpush1.msra.mxu0 %v540
        %727 = vmatprep.subr.mxu0 %v545
        %728 = vmatpush1.msra.mxu0 %v544
        %729 = vmatprep.subr.mxu0 %v549
        %730 = vmatpush1.msra.mxu0 %v548
        %731 = vmatprep.subr.mxu0 %v553
        %732 = vmatpush1.msra.mxu0 %v552
        %733 = vmatprep.subr.mxu0 %v557
        %734 = vmatpush1.msra.mxu0 %v556
        %735 = vmatprep.subr.mxu0 %v561
        %736 = vmatpush1.msra.mxu0 %v560
        %737 = vmatprep.subr.mxu0 %v565
        %738 = vmatpush1.msra.mxu0 %v564
        %739 = vmatprep.subr.mxu0 %v569
        %740 = vmatpush1.msra.mxu0 %v568
        %741 = vmatprep.subr.mxu0 %v573
        %742 = vmatpush1.msra.mxu0 %v572
        %743 = vmatprep.subr.mxu0 %v577
        %744 = vmatpush1.msra.mxu0 %v576
        %745 = vmatprep.subr.mxu0 %v581
        %746 = vmatpush1.msra.mxu0 %v580
        %747 = vmatprep.subr.mxu0 %v585
        %748 = vmatpush1.msra.mxu0 %v584
        %749 = vmatprep.subr.mxu0 %v589
        %750 = vmatpush1.msra.mxu0 %v588
        %751 = vmatprep.subr.mxu0 %v593
        %752 = vmatpush1.msra.mxu0 %v592
        %753 = vmatprep.subr.mxu0 %v597
        %754 = vmatpush1.msra.mxu0 %v596
        %755 = vmatprep.subr.mxu0 %v601
        %756 = vmatpush1.msra.mxu0 %v600
        %757 = vmatprep.subr.mxu0 %v605
        %758 = vmatpush1.msra.mxu0 %v604
        %759 = vmatprep.subr.mxu0 %v609
        %760 = vmatpush1.msra.mxu0 %v608
        %761 = vmatprep.subr.mxu0 %v613
        %762 = vmatpush1.msra.mxu0 %v612
        %763 = vmatprep.subr.mxu0 %v617
        %764 = vmatpush1.msra.mxu0 %v616
        %765 = vmatprep.subr.mxu0 %v621
        %766 = vmatpush1.msra.mxu0 %v620
        %767 = vmatprep.subr.mxu0 %v625
        %768 = vmatpush1.msra.mxu0 %v624
        %769 = vmatprep.subr.mxu0 %v629
        %770 = vmatpush1.msra.mxu0 %v628
        %771 = vmatprep.subr.mxu0 %v633
        %772 = vmatpush1.msra.mxu0 %v632
        %773 = vmatprep.subr.mxu0 %v637
        %774 = vmatpush1.msra.mxu0 %v636
        %775 = vmatprep.subr.mxu0 %v641
        %776 = vmatpush1.msra.mxu0 %v640
        %777 = vmatprep.mubr.f32.mxu0 %v513
        %778 = vmatmul.mubr.f32.gmra.mrb[0].mxu0 %v512
        %v779 = vpop.f32.mrb[0].mxu0
        %v780 = vadd.f32 0.0, %v779
        %v781 = vpop.f32.mrb[0].mxu0
        %v782 = vadd.f32 0.0, %v781
        %783 = vdwg.mxu0
        %v784 = vadd.f32 %v508, %v709
        %v785 = vadd.f32 %v509, %v711
        %v786 = vadd.f32 %v510, %v780
        %v787 = vadd.f32 %v511, %v782
        %788 = vst [vmem:[#allocation2] sm:$0xff] %v784
        %789 = vst [vmem:[#allocation2 + $0x8] sm:$0xff] %v785
        %790 = vst [vmem:[#allocation2 + $0x10] sm:$0xff] %v786
        %791 = vst [vmem:[#allocation2 + $0x18] sm:$0xff] %v787
        %p792 = scmp.eq.s32.totalorder %s25, 3
        // Predicated region
        $region56: #{gemma_attention.5} parent=46 // pred_check
          %p793 = pneg %p792
        $region57: #{gemma_attention.5} parent=46 // pred_check_branch
          %795 = sbr.rel (%p793) target = $region59
        $region58: #{gemma_attention.5} parent=46 // pred_region
          %v796 = vld [vmem:[#allocation2] sm:$0xff]
          %v797 = vld [vmem:[#allocation2 + $0x8] sm:$0xff]
          %v798 = vld [vmem:[#allocation2 + $0x10] sm:$0xff]
          %v799 = vld [vmem:[#allocation2 + $0x18] sm:$0xff]
          %800 = vst [vmem:[%s484] sm:$0xff] %v796
          %801 = vst [vmem:[%s484 + $0x8] sm:$0xff] %v797
          %802 = vst [vmem:[%s484 + $0x10] sm:$0xff] %v798
          %803 = vst [vmem:[%s484 + $0x18] sm:$0xff] %v799
        $region59: #{gemma_attention.5} parent=46 // pred_fallthru
          _
        %s804 = sand.u32 %s112, 1
        %s805 = scalar_lea.sflag [#allocation5], %s804
        %s806 = sand.u32 %s112, 1
        %s807 = smul.addr %s806, 32
        %s808 = scalar_lea.vmem [#allocation4], %s807
        // Predicated region
        $region60: #{gemma_attention.5} parent=46 // pred_check
          %p809 = pneg %p122
        $region61: #{gemma_attention.5} parent=46 // pred_check_branch
          %811 = sbr.rel (%p809) target = $region63
        $region62: #{gemma_attention.5} parent=46 // pred_region
          %s812 = smul.u32 4, %s24
          %s814 = ssub.s32 512, 512
          %815 = vsyncadd %s805, %s814
          %s816 = smul.addr %s23, 8
          %s817 = sadd.s32 %s812, %s816
          %s818 = smul.addr %s22, 8
          %s819 = sadd.s32 %s817, %s818
          %s820 = smul.addr %s819, 128
          %s821 = scalar_lea.hbm %s2, %s820
          %s823 = sshll.u32 %s808, 4
          %s824 = int_to_ptr.vmem [resolvable:$true] %s823
          %826 = dma.vmem_to_hbm [thread:$0]  %s824, 512, %s821, %s805
        $region63: #{gemma_attention.5} parent=46 // pred_fallthru
          _
      $region47: #{gemma_attention.5} parent=5 // pred_fallthru
        _
      %p827 = scmp.le.s32.totalorder 2, %s11
      // Predicated region
      $region64: #{gemma_attention.5} parent=5 // pred_check
        %p828 = pneg %p827
      $region65: #{gemma_attention.5} parent=5 // pred_check_branch
        %830 = sbr.rel (%p828) target = $region67
      $region66: #{gemma_attention.5} parent=5 // pred_region
        %s831 = ssub.s32 %s11, 2
        // Predicated region
        $region68: #{gemma_attention.5} parent=66 // pred_check
          %p832 = pneg %p128
        $region69: #{gemma_attention.5} parent=66 // pred_check_branch
          %834 = sbr.rel (%p832) target = $region71
        $region70: #{gemma_attention.5} parent=66 // pred_region
          %s835 = sand.u32 %s113, 1
          %s836 = scalar_lea.sflag [#allocation5], %s835
          %s837 = sand.u32 %s113, 1
          %s838 = smul.addr %s837, 32
          %s839 = scalar_lea.vmem [#allocation4], %s838
          %840 = dma.done %s836, 512
        $region71: #{gemma_attention.5} parent=66 // pred_fallthru
          _
      $region67: #{gemma_attention.5} parent=5 // pred_fallthru
        _
    $region6: #{gemma_attention.5} parent=1 // loop_footer
      %s15 = sadd.s32 1, %s11
    $region7: #{gemma_attention.5} parent=1 // loop_footer_branch
      %10 = sbr.rel target = $region3
    $region8: #{gemma_attention.5} parent=1 // loop_exit
      _
    %841 = vsyncpa [#allocation5], 1
    %s842 = scalar_lea.sflag [#allocation5], 1
    %843 = vsyncpa %s842, 1

</llo_original>
